<compile_context>
chip_gen: v5e
topology: v5e:2x2
jax: 0.10.0
libtpu: 0.0.40
codegen_flags: <defaults>
</compile_context>

<pallas_src>
import functools

import jax
import jax.numpy as jnp
from jax.experimental import pallas as pl
from jax.experimental.pallas import tpu as pltpu


# ----------------------------------------------------------------------------
# Pallas kernel: one full decoder layer for one batch element
# ----------------------------------------------------------------------------
def decoder_layer_kernel(
    x_ref, enc_ref, sbias_ref, cbias_ref,
    sa_wqkv_ref, sa_bqkv_ref, sa_wo_ref, sa_bo_ref,
    ca_wqkv_ref, ca_bqkv_ref, ca_wo_ref, ca_bo_ref,
    ln_g_ref, ln_b_ref, w1_ref, b1_ref, w2_ref, b2_ref,
    out_ref, sattn_ref, cattn_ref,
    *, n_head: int,
):
    x = x_ref[0]          # (Lt, D) f32
    enc = enc_ref[0]      # (Ls, D) f32
    sbias = sbias_ref[0]  # (Lt, Lt) additive mask bias (0 / -1e9), precomputed
    cbias = cbias_ref[0]  # (Lt, Ls)

    D = x.shape[-1]
    H = n_head
    Dh = D // H
    scale = float(Dh) ** -0.5

    ln_g = ln_g_ref[...]  # (3, D) f32
    ln_b = ln_b_ref[...]  # (3, D) f32

    def layer_norm(v, i):
        mu = jnp.mean(v, axis=-1, keepdims=True)
        var = jnp.mean((v - mu) ** 2, axis=-1, keepdims=True)
        return (v - mu) * jax.lax.rsqrt(var + 1e-5) * ln_g[i] + ln_b[i]

    def bdot(a, b, dn):
        return jax.lax.dot_general(a, b, dn, preferred_element_type=jnp.float32)

    DN_PROJ = (((2,), (1,)), ((0,), (0,)))  # (H,L,D)  x (H,D,Dh) -> (H,L,Dh)
    DN_QK   = (((2,), (2,)), ((0,), (0,)))  # (H,Lq,Dh) x (H,Lk,Dh) -> (H,Lq,Lk)
    DN_PV   = (((2,), (1,)), ((0,), (0,)))  # (H,Lq,Lk) x (H,Lk,Dh) -> (H,Lq,Dh)
    DN_OUT  = (((2,), (1,)), ((0,), (0,)))  # (H,Lq,Dh) x (H,Dh,D)  -> (H,Lq,D)

    def mha(q_in, kv_in, wqkv_ref, bqkv_ref, wo_ref, bo_ref, bias, attn_ref):
        """All-head scaled-dot attention. q_in: (Lq, D) f32, kv_in: (Lk, D) f32."""
        Lq, Lk = q_in.shape[0], kv_in.shape[0]
        Wqkv = wqkv_ref[...]   # (3, H, D, Dh) bf16
        bqkv = bqkv_ref[...]   # (3, H, 1, Dh) f32

        qb = jnp.broadcast_to(q_in.astype(jnp.bfloat16)[None], (H, Lq, D))
        kvb = jnp.broadcast_to(kv_in.astype(jnp.bfloat16)[None], (H, Lk, D))

        # One batched MXU contraction (over full D) per projection.
        qh = bdot(qb, Wqkv[0], DN_PROJ) + bqkv[0]      # (H, Lq, Dh) f32
        kh = bdot(kvb, Wqkv[1], DN_PROJ) + bqkv[1]     # (H, Lk, Dh) f32
        vh = bdot(kvb, Wqkv[2], DN_PROJ) + bqkv[2]     # (H, Lk, Dh) f32
        qh = qh * scale                                # fold 1/sqrt(Dh) into q once

        # Scores for all heads in one batched contraction.
        s = bdot(qh.astype(jnp.bfloat16), kh.astype(jnp.bfloat16), DN_QK)
        s = s + bias[None]                             # hoisted mask bias (f32)

        m = jnp.max(s, axis=-1, keepdims=True)
        e = jnp.exp(s - m)
        p = e * pl.reciprocal(jnp.sum(e, axis=-1, keepdims=True), approx=True)
        attn_ref[0] = p                                # single (H, Lq, Lk) slab store

        ctx = bdot(p.astype(jnp.bfloat16), vh.astype(jnp.bfloat16), DN_PV)   # (H,Lq,Dh)
        out_h = bdot(ctx.astype(jnp.bfloat16), wo_ref[...], DN_OUT)          # (H,Lq,D)
        return jnp.sum(out_h, axis=0) + bo_ref[0]      # (Lq, D) f32

    # --- self attention block (post-norm, residual dropout = eval no-op) ---
    x1 = layer_norm(
        x + mha(x, x, sa_wqkv_ref, sa_bqkv_ref, sa_wo_ref, sa_bo_ref,
                sbias, sattn_ref), 0)

    # --- encoder-decoder attention: key=value=enc_output, query=x1 ---
    x2 = layer_norm(
        x1 + mha(x1, enc, ca_wqkv_ref, ca_bqkv_ref, ca_wo_ref, ca_bo_ref,
                 cbias, cattn_ref), 1)

    # --- position-wise feed-forward (bf16 matmuls, f32 accumulate) ---
    hdn = jnp.maximum(
        jnp.dot(x2.astype(jnp.bfloat16), w1_ref[...],
                preferred_element_type=jnp.float32) + b1_ref[0], 0.0)
    ff = jnp.dot(hdn.astype(jnp.bfloat16), w2_ref[...],
                 preferred_element_type=jnp.float32) + b2_ref[0]
    out_ref[0] = layer_norm(x2 + ff, 2)


# ----------------------------------------------------------------------------
# Wrapper for one decoder layer (pallas_call)
# ----------------------------------------------------------------------------
def _prep_attn(w4, b4, n_head):
    """PyTorch-style pack (4,D,D)/(4,D) -> per-head MXU-friendly bf16 layouts."""
    D = w4.shape[-1]
    Dh = D // n_head
    # Wq/Wk/Wv: (D, D) -> (H, D, Dh)  (column blocks per head)
    wqkv = jnp.stack([w4[i].reshape(D, n_head, Dh).transpose(1, 0, 2)
                      for i in range(3)]).astype(jnp.bfloat16)       # (3, H, D, Dh)
    bqkv = jnp.stack([b4[i].reshape(n_head, 1, Dh)
                      for i in range(3)]).astype(jnp.float32)        # (3, H, 1, Dh)
    # Wo: (D, D) -> (H, Dh, D)  (row blocks per head)
    wo = w4[3].reshape(n_head, Dh, D).astype(jnp.bfloat16)           # (H, Dh, D)
    bo = b4[3].reshape(1, D).astype(jnp.float32)                     # (1, D)
    return wqkv, bqkv, wo, bo


def decoder_layer(x, enc, self_bias, cross_bias, lp, n_head):
    B, Lt, D = x.shape
    Ls = enc.shape[1]
    H = n_head

    sa_wqkv, sa_bqkv, sa_wo, sa_bo = _prep_attn(lp["sa_w"], lp["sa_b"], H)
    ca_wqkv, ca_bqkv, ca_wo, ca_bo = _prep_attn(lp["ca_w"], lp["ca_b"], H)
    w1 = lp["w1"].astype(jnp.bfloat16)
    w2 = lp["w2"].astype(jnp.bfloat16)

    def full(arr):
        nd = arr.ndim
        return pl.BlockSpec(arr.shape, lambda b, _nd=nd: (0,) * _nd)

    def batched(shape):
        nd = len(shape)
        return pl.BlockSpec((1,) + tuple(shape[1:]),
                            lambda b, _nd=nd: (b,) + (0,) * (_nd - 1))

    kernel = functools.partial(decoder_layer_kernel, n_head=H)

    in_arrays = (x, enc, self_bias, cross_bias,
                 sa_wqkv, sa_bqkv, sa_wo, sa_bo,
                 ca_wqkv, ca_bqkv, ca_wo, ca_bo,
                 lp["ln_g"], lp["ln_b"], w1, lp["b1"], w2, lp["b2"])

    in_specs = ([batched(x.shape), batched(enc.shape),
                 batched(self_bias.shape), batched(cross_bias.shape)]
                + [full(a) for a in in_arrays[4:]])

    out_shape = (
        jax.ShapeDtypeStruct((B, Lt, D), jnp.float32),
        jax.ShapeDtypeStruct((B, H, Lt, Lt), jnp.float32),
        jax.ShapeDtypeStruct((B, H, Lt, Ls), jnp.float32),
    )
    out_specs = (
        batched((B, Lt, D)),
        batched((B, H, Lt, Lt)),
        batched((B, H, Lt, Ls)),
    )
    return pl.pallas_call(
        kernel,
        out_shape=out_shape,
        grid=(B,),
        in_specs=in_specs,
        out_specs=out_specs,
        compiler_params=pltpu.CompilerParams(
            dimension_semantics=("parallel",)),
    )(*in_arrays)


# ----------------------------------------------------------------------------
# Full SelfAttDecoder forward (decoder_normalize_before=False -> post-norm)
# ----------------------------------------------------------------------------
def sinusoidal_pe(L, D):
    pos = jnp.arange(L, dtype=jnp.float32)[:, None]
    i = jnp.arange(D, dtype=jnp.float32)[None, :]
    angle = pos / jnp.power(10000.0, (2.0 * jnp.floor(i / 2.0)) / D)
    return jnp.where((jnp.arange(D) % 2) == 0, jnp.sin(angle), jnp.cos(angle))


def self_att_decoder(trg_seq, src_seq, enc_output, trg_mask, src_mask,
                     emb_table, layer_params, n_head):
    B, Lt = trg_seq.shape
    _, Ls = src_seq.shape
    D = emb_table.shape[1]

    # target word embedding (glue, plain JAX)
    # TODO(synk): WordEmbedding internals unspecified in the reference; using
    # scaled lookup + sinusoidal positional encoding.
    dec = emb_table[trg_seq] * (float(D) ** 0.5) + sinusoidal_pe(Lt, D)[None]
    dec = dec.astype(jnp.float32)

    # masks (1.0 = attend), matching trg_self_attn_mask = (trg_mask + tril) > 1,
    # then converted ONCE to an additive bias (0 attend / -1e9 masked).
    causal = jnp.tril(jnp.ones((Lt, Lt), jnp.float32))
    self_mask = ((trg_mask.astype(jnp.float32)[:, None, :] + causal[None]) > 1.0
                 ).astype(jnp.float32)
    cross_mask = jnp.broadcast_to(
        src_mask.astype(jnp.float32)[:, None, :], (B, Lt, Ls)).astype(jnp.float32)
    self_bias = (self_mask - 1.0) * 1e9
    cross_bias = (cross_mask - 1.0) * 1e9

    trg_self_attns = trg_src_attns = None
    for lp in layer_params:
        dec, trg_self_attns, trg_src_attns = decoder_layer(
            dec, enc_output, self_bias, cross_bias, lp, n_head)
    return dec, trg_self_attns, trg_src_attns


# ----------------------------------------------------------------------------
# Deterministic parameter construction (reference PyTorch-style layouts)
# ----------------------------------------------------------------------------
def make_layer_params(key, D, Fdim):
    ks = jax.random.split(key, 4)
    n = lambda k, s: (jax.random.normal(k, s, jnp.float32) * 0.05)
    return {
        "sa_w": n(ks[0], (4, D, D)), "sa_b": jnp.zeros((4, D), jnp.float32),
        "ca_w": n(ks[1], (4, D, D)), "ca_b": jnp.zeros((4, D), jnp.float32),
        "ln_g": jnp.ones((3, D), jnp.float32), "ln_b": jnp.zeros((3, D), jnp.float32),
        "w1": n(ks[2], (D, Fdim)), "b1": jnp.zeros((1, Fdim), jnp.float32),
        "w2": n(ks[3], (Fdim, D)), "b2": jnp.zeros((1, D), jnp.float32),
    }


if __name__ == "__main__":
    B, Lt, Ls = 2, 8, 8
    D, H, Fdim = 32, 4, 64
    n_layers, vocab = 2, 50

    key = jax.random.PRNGKey(0)
    k_trg, k_src, k_enc, k_emb, k_layers = jax.random.split(key, 5)

    trg_seq = jax.random.randint(k_trg, (B, Lt), 0, vocab, dtype=jnp.int32)
    src_seq = jax.random.randint(k_src, (B, Ls), 0, vocab, dtype=jnp.int32)
    enc_output = jax.random.normal(k_enc, (B, Ls, D), jnp.float32)

    trg_mask = jnp.ones((B, Lt), jnp.float32).at[1, 6:].set(0.0)
    src_mask = jnp.ones((B, Ls), jnp.float32).at[1, 5:].set(0.0)

    emb_table = jax.random.normal(k_emb, (vocab, D), jnp.float32) * 0.05
    layer_keys = jax.random.split(k_layers, n_layers)
    layer_params = [make_layer_params(k, D, Fdim) for k in layer_keys]

    dec_out, self_attns, src_attns = self_att_decoder(
        trg_seq, src_seq, enc_output, trg_mask, src_mask,
        emb_table, layer_params, n_head=H)
    jax.block_until_ready((dec_out, self_attns, src_attns))

    assert dec_out.shape == (B, Lt, D)
    assert self_attns.shape == (B, H, Lt, Lt)
    assert src_attns.shape == (B, H, Lt, Ls)
    assert bool(jnp.all(jnp.isfinite(dec_out)))
    assert bool(jnp.all(jnp.isfinite(self_attns)))
    assert bool(jnp.all(jnp.isfinite(src_attns)))
    print("KERNEL_OK")
</pallas_src>

<mosaic_0001>
module attributes {stable_mosaic.version = 11 : i64} {
  func.func @decoder_layer_kernel(%arg0: i32, %arg1: memref<1x8x32xf32, #tpu.memory_space<vmem>>, %arg2: memref<1x8x32xf32, #tpu.memory_space<vmem>>, %arg3: memref<1x8x8xf32, #tpu.memory_space<vmem>>, %arg4: memref<1x8x8xf32, #tpu.memory_space<vmem>>, %arg5: memref<3x4x32x8xbf16, #tpu.memory_space<vmem>>, %arg6: memref<3x4x1x8xf32, #tpu.memory_space<vmem>>, %arg7: memref<4x8x32xbf16, #tpu.memory_space<vmem>>, %arg8: memref<1x32xf32, #tpu.memory_space<vmem>>, %arg9: memref<3x4x32x8xbf16, #tpu.memory_space<vmem>>, %arg10: memref<3x4x1x8xf32, #tpu.memory_space<vmem>>, %arg11: memref<4x8x32xbf16, #tpu.memory_space<vmem>>, %arg12: memref<1x32xf32, #tpu.memory_space<vmem>>, %arg13: memref<3x32xf32, #tpu.memory_space<vmem>>, %arg14: memref<3x32xf32, #tpu.memory_space<vmem>>, %arg15: memref<32x64xbf16, #tpu.memory_space<vmem>>, %arg16: memref<1x64xf32, #tpu.memory_space<vmem>>, %arg17: memref<64x32xbf16, #tpu.memory_space<vmem>>, %arg18: memref<1x32xf32, #tpu.memory_space<vmem>>, %arg19: memref<1x8x32xf32, #tpu.memory_space<vmem>>, %arg20: memref<1x4x8x8xf32, #tpu.memory_space<vmem>>, %arg21: memref<1x4x8x8xf32, #tpu.memory_space<vmem>>) attributes {dimension_semantics = [#tpu.dimension_semantics<parallel>], iteration_bounds = array<i64: 2>, scalar_prefetch = 0 : i64, scratch_operands = 0 : i64, tpu.core_type = #tpu.core_type<tc>, window_params = [{transform_indices = @transform_0, window_bounds = array<i64: 1, 8, 32>}, {transform_indices = @transform_1, window_bounds = array<i64: 1, 8, 32>}, {transform_indices = @transform_2, window_bounds = array<i64: 1, 8, 8>}, {transform_indices = @transform_3, window_bounds = array<i64: 1, 8, 8>}, {pipeline_mode = #tpu.pipeline_mode<synchronous>, transform_indices = @transform_4, window_bounds = array<i64: 3, 4, 32, 8>}, {pipeline_mode = #tpu.pipeline_mode<synchronous>, transform_indices = @transform_5, window_bounds = array<i64: 3, 4, 1, 8>}, {pipeline_mode = #tpu.pipeline_mode<synchronous>, transform_indices = @transform_6, window_bounds = array<i64: 4, 8, 32>}, {pipeline_mode = #tpu.pipeline_mode<synchronous>, transform_indices = @transform_7, window_bounds = array<i64: 1, 32>}, {pipeline_mode = #tpu.pipeline_mode<synchronous>, transform_indices = @transform_8, window_bounds = array<i64: 3, 4, 32, 8>}, {pipeline_mode = #tpu.pipeline_mode<synchronous>, transform_indices = @transform_9, window_bounds = array<i64: 3, 4, 1, 8>}, {pipeline_mode = #tpu.pipeline_mode<synchronous>, transform_indices = @transform_10, window_bounds = array<i64: 4, 8, 32>}, {pipeline_mode = #tpu.pipeline_mode<synchronous>, transform_indices = @transform_11, window_bounds = array<i64: 1, 32>}, {pipeline_mode = #tpu.pipeline_mode<synchronous>, transform_indices = @transform_12, window_bounds = array<i64: 3, 32>}, {pipeline_mode = #tpu.pipeline_mode<synchronous>, transform_indices = @transform_13, window_bounds = array<i64: 3, 32>}, {pipeline_mode = #tpu.pipeline_mode<synchronous>, transform_indices = @transform_14, window_bounds = array<i64: 32, 64>}, {pipeline_mode = #tpu.pipeline_mode<synchronous>, transform_indices = @transform_15, window_bounds = array<i64: 1, 64>}, {pipeline_mode = #tpu.pipeline_mode<synchronous>, transform_indices = @transform_16, window_bounds = array<i64: 64, 32>}, {pipeline_mode = #tpu.pipeline_mode<synchronous>, transform_indices = @transform_17, window_bounds = array<i64: 1, 32>}, {transform_indices = @transform_18, window_bounds = array<i64: 1, 8, 32>}, {transform_indices = @transform_19, window_bounds = array<i64: 1, 4, 8, 8>}, {transform_indices = @transform_20, window_bounds = array<i64: 1, 4, 8, 8>}]} {
    %c0 = arith.constant 0 : index
    %c0_0 = arith.constant 0 : index
    %c0_1 = arith.constant 0 : index
    %0 = vector.load %arg1[%c0, %c0_0, %c0_1] : memref<1x8x32xf32, #tpu.memory_space<vmem>>, vector<1x8x32xf32>
    %1 = vector.shape_cast %0 : vector<1x8x32xf32> to vector<8x32xf32>
    %c0_2 = arith.constant 0 : index
    %c0_3 = arith.constant 0 : index
    %c0_4 = arith.constant 0 : index
    %2 = vector.load %arg2[%c0_2, %c0_3, %c0_4] : memref<1x8x32xf32, #tpu.memory_space<vmem>>, vector<1x8x32xf32>
    %3 = vector.shape_cast %2 : vector<1x8x32xf32> to vector<8x32xf32>
    %c0_5 = arith.constant 0 : index
    %c0_6 = arith.constant 0 : index
    %c0_7 = arith.constant 0 : index
    %4 = vector.load %arg3[%c0_5, %c0_6, %c0_7] : memref<1x8x8xf32, #tpu.memory_space<vmem>>, vector<1x8x8xf32>
    %5 = vector.shape_cast %4 : vector<1x8x8xf32> to vector<8x8xf32>
    %c0_8 = arith.constant 0 : index
    %c0_9 = arith.constant 0 : index
    %c0_10 = arith.constant 0 : index
    %6 = vector.load %arg4[%c0_8, %c0_9, %c0_10] : memref<1x8x8xf32, #tpu.memory_space<vmem>>, vector<1x8x8xf32>
    %7 = vector.shape_cast %6 : vector<1x8x8xf32> to vector<8x8xf32>
    %c0_11 = arith.constant 0 : index
    %c0_12 = arith.constant 0 : index
    %8 = vector.load %arg13[%c0_11, %c0_12] : memref<3x32xf32, #tpu.memory_space<vmem>>, vector<3x32xf32>
    %c0_13 = arith.constant 0 : index
    %c0_14 = arith.constant 0 : index
    %9 = vector.load %arg14[%c0_13, %c0_14] : memref<3x32xf32, #tpu.memory_space<vmem>>, vector<3x32xf32>
    %c0_15 = arith.constant 0 : index
    %c0_16 = arith.constant 0 : index
    %c0_17 = arith.constant 0 : index
    %c0_18 = arith.constant 0 : index
    %10 = vector.load %arg5[%c0_15, %c0_16, %c0_17, %c0_18] : memref<3x4x32x8xbf16, #tpu.memory_space<vmem>>, vector<3x4x32x8xbf16>
    %c0_19 = arith.constant 0 : index
    %c0_20 = arith.constant 0 : index
    %c0_21 = arith.constant 0 : index
    %c0_22 = arith.constant 0 : index
    %11 = vector.load %arg6[%c0_19, %c0_20, %c0_21, %c0_22] : memref<3x4x1x8xf32, #tpu.memory_space<vmem>>, vector<3x4x1x8xf32>
    %12 = arith.truncf %1 : vector<8x32xf32> to vector<8x32xbf16>
    %13 = vector.shape_cast %12 : vector<8x32xbf16> to vector<1x8x32xbf16>
    %14 = vector.shape_cast %13 : vector<1x8x32xbf16> to vector<1x8x32xbf16>
    %15 = vector.broadcast %14 : vector<1x8x32xbf16> to vector<4x8x32xbf16>
    %16 = arith.truncf %1 : vector<8x32xf32> to vector<8x32xbf16>
    %17 = vector.shape_cast %16 : vector<8x32xbf16> to vector<1x8x32xbf16>
    %18 = vector.shape_cast %17 : vector<1x8x32xbf16> to vector<1x8x32xbf16>
    %19 = vector.broadcast %18 : vector<1x8x32xbf16> to vector<4x8x32xbf16>
    %20 = vector.extract_strided_slice %10 {offsets = [0, 0, 0, 0], sizes = [1, 4, 32, 8], strides = [1, 1, 1, 1]} : vector<3x4x32x8xbf16> to vector<1x4x32x8xbf16>
    %21 = vector.shape_cast %20 : vector<1x4x32x8xbf16> to vector<4x32x8xbf16>
    %cst = arith.constant dense<0.000000e+00> : vector<4x8x8xf32>
    %22 = tpu.matmul %15, %21, %cst {dimension_numbers = #tpu.dot_dimension_numbers<[2], [1], [1], [2], [0, 0, 0, 1, 1, 2], [0], [0]>} : vector<4x8x32xbf16>, vector<4x32x8xbf16>, vector<4x8x8xf32> -> vector<4x8x8xf32>
    %23 = vector.extract_strided_slice %11 {offsets = [0, 0, 0, 0], sizes = [1, 4, 1, 8], strides = [1, 1, 1, 1]} : vector<3x4x1x8xf32> to vector<1x4x1x8xf32>
    %24 = vector.shape_cast %23 : vector<1x4x1x8xf32> to vector<4x1x8xf32>
    %25 = vector.broadcast %24 : vector<4x1x8xf32> to vector<4x8x8xf32>
    %26 = arith.addf %22, %25 : vector<4x8x8xf32>
    %27 = vector.extract_strided_slice %10 {offsets = [1, 0, 0, 0], sizes = [1, 4, 32, 8], strides = [1, 1, 1, 1]} : vector<3x4x32x8xbf16> to vector<1x4x32x8xbf16>
    %28 = vector.shape_cast %27 : vector<1x4x32x8xbf16> to vector<4x32x8xbf16>
    %cst_23 = arith.constant dense<0.000000e+00> : vector<4x8x8xf32>
    %29 = tpu.matmul %19, %28, %cst_23 {dimension_numbers = #tpu.dot_dimension_numbers<[2], [1], [1], [2], [0, 0, 0, 1, 1, 2], [0], [0]>} : vector<4x8x32xbf16>, vector<4x32x8xbf16>, vector<4x8x8xf32> -> vector<4x8x8xf32>
    %30 = vector.extract_strided_slice %11 {offsets = [1, 0, 0, 0], sizes = [1, 4, 1, 8], strides = [1, 1, 1, 1]} : vector<3x4x1x8xf32> to vector<1x4x1x8xf32>
    %31 = vector.shape_cast %30 : vector<1x4x1x8xf32> to vector<4x1x8xf32>
    %32 = vector.broadcast %31 : vector<4x1x8xf32> to vector<4x8x8xf32>
    %33 = arith.addf %29, %32 : vector<4x8x8xf32>
    %34 = vector.extract_strided_slice %10 {offsets = [2, 0, 0, 0], sizes = [1, 4, 32, 8], strides = [1, 1, 1, 1]} : vector<3x4x32x8xbf16> to vector<1x4x32x8xbf16>
    %35 = vector.shape_cast %34 : vector<1x4x32x8xbf16> to vector<4x32x8xbf16>
    %cst_24 = arith.constant dense<0.000000e+00> : vector<4x8x8xf32>
    %36 = tpu.matmul %19, %35, %cst_24 {dimension_numbers = #tpu.dot_dimension_numbers<[2], [1], [1], [2], [0, 0, 0, 1, 1, 2], [0], [0]>} : vector<4x8x32xbf16>, vector<4x32x8xbf16>, vector<4x8x8xf32> -> vector<4x8x8xf32>
    %37 = vector.extract_strided_slice %11 {offsets = [2, 0, 0, 0], sizes = [1, 4, 1, 8], strides = [1, 1, 1, 1]} : vector<3x4x1x8xf32> to vector<1x4x1x8xf32>
    %38 = vector.shape_cast %37 : vector<1x4x1x8xf32> to vector<4x1x8xf32>
    %39 = vector.broadcast %38 : vector<4x1x8xf32> to vector<4x8x8xf32>
    %40 = arith.addf %36, %39 : vector<4x8x8xf32>
    %cst_25 = arith.constant 0.353553385 : f32
    %41 = vector.broadcast %cst_25 : f32 to vector<4x8x8xf32>
    %42 = arith.mulf %26, %41 : vector<4x8x8xf32>
    %43 = arith.truncf %42 : vector<4x8x8xf32> to vector<4x8x8xbf16>
    %44 = arith.truncf %33 : vector<4x8x8xf32> to vector<4x8x8xbf16>
    %cst_26 = arith.constant dense<0.000000e+00> : vector<4x8x8xf32>
    %45 = tpu.matmul %43, %44, %cst_26 {dimension_numbers = #tpu.dot_dimension_numbers<[2], [2], [1], [1], [0, 0, 0, 1, 1, 1], [0], [0]>} : vector<4x8x8xbf16>, vector<4x8x8xbf16>, vector<4x8x8xf32> -> vector<4x8x8xf32>
    %46 = vector.shape_cast %5 : vector<8x8xf32> to vector<1x8x8xf32>
    %47 = vector.broadcast %46 : vector<1x8x8xf32> to vector<4x8x8xf32>
    %48 = arith.addf %45, %47 : vector<4x8x8xf32>
    %cst_27 = arith.constant dense<0xFF800000> : vector<4x8xf32>
    %49 = vector.multi_reduction <maximumf>, %48, %cst_27 [2] : vector<4x8x8xf32> to vector<4x8xf32>
    %50 = vector.shape_cast %49 : vector<4x8xf32> to vector<4x8x1xf32>
    %51 = vector.broadcast %50 : vector<4x8x1xf32> to vector<4x8x8xf32>
    %52 = arith.subf %48, %51 : vector<4x8x8xf32>
    %53 = math.exp %52 : vector<4x8x8xf32>
    %cst_28 = arith.constant dense<0.000000e+00> : vector<4x8xf32>
    %54 = vector.multi_reduction <add>, %53, %cst_28 [2] : vector<4x8x8xf32> to vector<4x8xf32>
    %55 = vector.shape_cast %54 : vector<4x8xf32> to vector<4x8x1xf32>
    %56 = tpu.reciprocal %55 {approx = true} : vector<4x8x1xf32> -> vector<4x8x1xf32>
    %57 = vector.broadcast %56 : vector<4x8x1xf32> to vector<4x8x8xf32>
    %58 = arith.mulf %53, %57 : vector<4x8x8xf32>
    %c0_29 = arith.constant 0 : index
    %c0_30 = arith.constant 0 : index
    %c0_31 = arith.constant 0 : index
    %c0_32 = arith.constant 0 : index
    %59 = vector.load %arg20[%c0_29, %c0_30, %c0_31, %c0_32] : memref<1x4x8x8xf32, #tpu.memory_space<vmem>>, vector<1x4x8x8xf32>
    %60 = vector.shape_cast %59 : vector<1x4x8x8xf32> to vector<4x8x8xf32>
    %61 = vector.shape_cast %58 : vector<4x8x8xf32> to vector<1x4x8x8xf32>
    tpu.vector_store %arg20[%c0_29, %c0_30, %c0_31, %c0_32], %61 {strides = array<i32>} : memref<1x4x8x8xf32, #tpu.memory_space<vmem>>, vector<1x4x8x8xf32>,
    %62 = arith.truncf %58 : vector<4x8x8xf32> to vector<4x8x8xbf16>
    %63 = arith.truncf %40 : vector<4x8x8xf32> to vector<4x8x8xbf16>
    %cst_33 = arith.constant dense<0.000000e+00> : vector<4x8x8xf32>
    %64 = tpu.matmul %62, %63, %cst_33 {dimension_numbers = #tpu.dot_dimension_numbers<[2], [1], [1], [2], [0, 0, 0, 1, 1, 2], [0], [0]>} : vector<4x8x8xbf16>, vector<4x8x8xbf16>, vector<4x8x8xf32> -> vector<4x8x8xf32>
    %65 = arith.truncf %64 : vector<4x8x8xf32> to vector<4x8x8xbf16>
    %c0_34 = arith.constant 0 : index
    %c0_35 = arith.constant 0 : index
    %c0_36 = arith.constant 0 : index
    %66 = vector.load %arg7[%c0_34, %c0_35, %c0_36] : memref<4x8x32xbf16, #tpu.memory_space<vmem>>, vector<4x8x32xbf16>
    %cst_37 = arith.constant dense<0.000000e+00> : vector<4x8x32xf32>
    %67 = tpu.matmul %65, %66, %cst_37 {dimension_numbers = #tpu.dot_dimension_numbers<[2], [1], [1], [2], [0, 0, 0, 1, 1, 2], [0], [0]>} : vector<4x8x8xbf16>, vector<4x8x32xbf16>, vector<4x8x32xf32> -> vector<4x8x32xf32>
    %cst_38 = arith.constant dense<0.000000e+00> : vector<8x32xf32>
    %68 = vector.multi_reduction <add>, %67, %cst_38 [0] : vector<4x8x32xf32> to vector<8x32xf32>
    %c0_39 = arith.constant 0 : index
    %c0_40 = arith.constant 0 : index
    %69 = vector.load %arg8[%c0_39, %c0_40] : memref<1x32xf32, #tpu.memory_space<vmem>>, vector<1x32xf32>
    %70 = vector.shape_cast %69 : vector<1x32xf32> to vector<32xf32>
    %71 = vector.shape_cast %70 : vector<32xf32> to vector<1x32xf32>
    %72 = vector.broadcast %71 : vector<1x32xf32> to vector<8x32xf32>
    %73 = arith.addf %68, %72 : vector<8x32xf32>
    %74 = arith.addf %1, %73 : vector<8x32xf32>
    %cst_41 = arith.constant dense<0.000000e+00> : vector<8xf32>
    %75 = vector.multi_reduction <add>, %74, %cst_41 [1] : vector<8x32xf32> to vector<8xf32>
    %76 = vector.shape_cast %75 : vector<8xf32> to vector<8x1xf32>
    %cst_42 = arith.constant 3.200000e+01 : f32
    %77 = vector.broadcast %cst_42 : f32 to vector<8x1xf32>
    %78 = arith.divf %76, %77 : vector<8x1xf32>
    %79 = vector.broadcast %78 : vector<8x1xf32> to vector<8x32xf32>
    %80 = arith.subf %74, %79 : vector<8x32xf32>
    %81 = arith.mulf %80, %80 : vector<8x32xf32>
    %cst_43 = arith.constant dense<0.000000e+00> : vector<8xf32>
    %82 = vector.multi_reduction <add>, %81, %cst_43 [1] : vector<8x32xf32> to vector<8xf32>
    %83 = vector.shape_cast %82 : vector<8xf32> to vector<8x1xf32>
    %cst_44 = arith.constant 3.200000e+01 : f32
    %84 = vector.broadcast %cst_44 : f32 to vector<8x1xf32>
    %85 = arith.divf %83, %84 : vector<8x1xf32>
    %86 = vector.broadcast %78 : vector<8x1xf32> to vector<8x32xf32>
    %87 = arith.subf %74, %86 : vector<8x32xf32>
    %cst_45 = arith.constant 9.99999974E-6 : f32
    %88 = vector.broadcast %cst_45 : f32 to vector<8x1xf32>
    %89 = arith.addf %85, %88 : vector<8x1xf32>
    %90 = math.rsqrt %89 : vector<8x1xf32>
    %91 = vector.broadcast %90 : vector<8x1xf32> to vector<8x32xf32>
    %92 = arith.mulf %87, %91 : vector<8x32xf32>
    %93 = vector.extract_strided_slice %8 {offsets = [0, 0], sizes = [1, 32], strides = [1, 1]} : vector<3x32xf32> to vector<1x32xf32>
    %94 = vector.shape_cast %93 : vector<1x32xf32> to vector<32xf32>
    %95 = vector.shape_cast %94 : vector<32xf32> to vector<1x32xf32>
    %96 = vector.broadcast %95 : vector<1x32xf32> to vector<8x32xf32>
    %97 = arith.mulf %92, %96 : vector<8x32xf32>
    %98 = vector.extract_strided_slice %9 {offsets = [0, 0], sizes = [1, 32], strides = [1, 1]} : vector<3x32xf32> to vector<1x32xf32>
    %99 = vector.shape_cast %98 : vector<1x32xf32> to vector<32xf32>
    %100 = vector.shape_cast %99 : vector<32xf32> to vector<1x32xf32>
    %101 = vector.broadcast %100 : vector<1x32xf32> to vector<8x32xf32>
    %102 = arith.addf %97, %101 : vector<8x32xf32>
    %c0_46 = arith.constant 0 : index
    %c0_47 = arith.constant 0 : index
    %c0_48 = arith.constant 0 : index
    %c0_49 = arith.constant 0 : index
    %103 = vector.load %arg9[%c0_46, %c0_47, %c0_48, %c0_49] : memref<3x4x32x8xbf16, #tpu.memory_space<vmem>>, vector<3x4x32x8xbf16>
    %c0_50 = arith.constant 0 : index
    %c0_51 = arith.constant 0 : index
    %c0_52 = arith.constant 0 : index
    %c0_53 = arith.constant 0 : index
    %104 = vector.load %arg10[%c0_50, %c0_51, %c0_52, %c0_53] : memref<3x4x1x8xf32, #tpu.memory_space<vmem>>, vector<3x4x1x8xf32>
    %105 = arith.truncf %102 : vector<8x32xf32> to vector<8x32xbf16>
    %106 = vector.shape_cast %105 : vector<8x32xbf16> to vector<1x8x32xbf16>
    %107 = vector.shape_cast %106 : vector<1x8x32xbf16> to vector<1x8x32xbf16>
    %108 = vector.broadcast %107 : vector<1x8x32xbf16> to vector<4x8x32xbf16>
    %109 = arith.truncf %3 : vector<8x32xf32> to vector<8x32xbf16>
    %110 = vector.shape_cast %109 : vector<8x32xbf16> to vector<1x8x32xbf16>
    %111 = vector.shape_cast %110 : vector<1x8x32xbf16> to vector<1x8x32xbf16>
    %112 = vector.broadcast %111 : vector<1x8x32xbf16> to vector<4x8x32xbf16>
    %113 = vector.extract_strided_slice %103 {offsets = [0, 0, 0, 0], sizes = [1, 4, 32, 8], strides = [1, 1, 1, 1]} : vector<3x4x32x8xbf16> to vector<1x4x32x8xbf16>
    %114 = vector.shape_cast %113 : vector<1x4x32x8xbf16> to vector<4x32x8xbf16>
    %cst_54 = arith.constant dense<0.000000e+00> : vector<4x8x8xf32>
    %115 = tpu.matmul %108, %114, %cst_54 {dimension_numbers = #tpu.dot_dimension_numbers<[2], [1], [1], [2], [0, 0, 0, 1, 1, 2], [0], [0]>} : vector<4x8x32xbf16>, vector<4x32x8xbf16>, vector<4x8x8xf32> -> vector<4x8x8xf32>
    %116 = vector.extract_strided_slice %104 {offsets = [0, 0, 0, 0], sizes = [1, 4, 1, 8], strides = [1, 1, 1, 1]} : vector<3x4x1x8xf32> to vector<1x4x1x8xf32>
    %117 = vector.shape_cast %116 : vector<1x4x1x8xf32> to vector<4x1x8xf32>
    %118 = vector.broadcast %117 : vector<4x1x8xf32> to vector<4x8x8xf32>
    %119 = arith.addf %115, %118 : vector<4x8x8xf32>
    %120 = vector.extract_strided_slice %103 {offsets = [1, 0, 0, 0], sizes = [1, 4, 32, 8], strides = [1, 1, 1, 1]} : vector<3x4x32x8xbf16> to vector<1x4x32x8xbf16>
    %121 = vector.shape_cast %120 : vector<1x4x32x8xbf16> to vector<4x32x8xbf16>
    %cst_55 = arith.constant dense<0.000000e+00> : vector<4x8x8xf32>
    %122 = tpu.matmul %112, %121, %cst_55 {dimension_numbers = #tpu.dot_dimension_numbers<[2], [1], [1], [2], [0, 0, 0, 1, 1, 2], [0], [0]>} : vector<4x8x32xbf16>, vector<4x32x8xbf16>, vector<4x8x8xf32> -> vector<4x8x8xf32>
    %123 = vector.extract_strided_slice %104 {offsets = [1, 0, 0, 0], sizes = [1, 4, 1, 8], strides = [1, 1, 1, 1]} : vector<3x4x1x8xf32> to vector<1x4x1x8xf32>
    %124 = vector.shape_cast %123 : vector<1x4x1x8xf32> to vector<4x1x8xf32>
    %125 = vector.broadcast %124 : vector<4x1x8xf32> to vector<4x8x8xf32>
    %126 = arith.addf %122, %125 : vector<4x8x8xf32>
    %127 = vector.extract_strided_slice %103 {offsets = [2, 0, 0, 0], sizes = [1, 4, 32, 8], strides = [1, 1, 1, 1]} : vector<3x4x32x8xbf16> to vector<1x4x32x8xbf16>
    %128 = vector.shape_cast %127 : vector<1x4x32x8xbf16> to vector<4x32x8xbf16>
    %cst_56 = arith.constant dense<0.000000e+00> : vector<4x8x8xf32>
    %129 = tpu.matmul %112, %128, %cst_56 {dimension_numbers = #tpu.dot_dimension_numbers<[2], [1], [1], [2], [0, 0, 0, 1, 1, 2], [0], [0]>} : vector<4x8x32xbf16>, vector<4x32x8xbf16>, vector<4x8x8xf32> -> vector<4x8x8xf32>
    %130 = vector.extract_strided_slice %104 {offsets = [2, 0, 0, 0], sizes = [1, 4, 1, 8], strides = [1, 1, 1, 1]} : vector<3x4x1x8xf32> to vector<1x4x1x8xf32>
    %131 = vector.shape_cast %130 : vector<1x4x1x8xf32> to vector<4x1x8xf32>
    %132 = vector.broadcast %131 : vector<4x1x8xf32> to vector<4x8x8xf32>
    %133 = arith.addf %129, %132 : vector<4x8x8xf32>
    %cst_57 = arith.constant 0.353553385 : f32
    %134 = vector.broadcast %cst_57 : f32 to vector<4x8x8xf32>
    %135 = arith.mulf %119, %134 : vector<4x8x8xf32>
    %136 = arith.truncf %135 : vector<4x8x8xf32> to vector<4x8x8xbf16>
    %137 = arith.truncf %126 : vector<4x8x8xf32> to vector<4x8x8xbf16>
    %cst_58 = arith.constant dense<0.000000e+00> : vector<4x8x8xf32>
    %138 = tpu.matmul %136, %137, %cst_58 {dimension_numbers = #tpu.dot_dimension_numbers<[2], [2], [1], [1], [0, 0, 0, 1, 1, 1], [0], [0]>} : vector<4x8x8xbf16>, vector<4x8x8xbf16>, vector<4x8x8xf32> -> vector<4x8x8xf32>
    %139 = vector.shape_cast %7 : vector<8x8xf32> to vector<1x8x8xf32>
    %140 = vector.broadcast %139 : vector<1x8x8xf32> to vector<4x8x8xf32>
    %141 = arith.addf %138, %140 : vector<4x8x8xf32>
    %cst_59 = arith.constant dense<0xFF800000> : vector<4x8xf32>
    %142 = vector.multi_reduction <maximumf>, %141, %cst_59 [2] : vector<4x8x8xf32> to vector<4x8xf32>
    %143 = vector.shape_cast %142 : vector<4x8xf32> to vector<4x8x1xf32>
    %144 = vector.broadcast %143 : vector<4x8x1xf32> to vector<4x8x8xf32>
    %145 = arith.subf %141, %144 : vector<4x8x8xf32>
    %146 = math.exp %145 : vector<4x8x8xf32>
    %cst_60 = arith.constant dense<0.000000e+00> : vector<4x8xf32>
    %147 = vector.multi_reduction <add>, %146, %cst_60 [2] : vector<4x8x8xf32> to vector<4x8xf32>
    %148 = vector.shape_cast %147 : vector<4x8xf32> to vector<4x8x1xf32>
    %149 = tpu.reciprocal %148 {approx = true} : vector<4x8x1xf32> -> vector<4x8x1xf32>
    %150 = vector.broadcast %149 : vector<4x8x1xf32> to vector<4x8x8xf32>
    %151 = arith.mulf %146, %150 : vector<4x8x8xf32>
    %c0_61 = arith.constant 0 : index
    %c0_62 = arith.constant 0 : index
    %c0_63 = arith.constant 0 : index
    %c0_64 = arith.constant 0 : index
    %152 = vector.load %arg21[%c0_61, %c0_62, %c0_63, %c0_64] : memref<1x4x8x8xf32, #tpu.memory_space<vmem>>, vector<1x4x8x8xf32>
    %153 = vector.shape_cast %152 : vector<1x4x8x8xf32> to vector<4x8x8xf32>
    %154 = vector.shape_cast %151 : vector<4x8x8xf32> to vector<1x4x8x8xf32>
    tpu.vector_store %arg21[%c0_61, %c0_62, %c0_63, %c0_64], %154 {strides = array<i32>} : memref<1x4x8x8xf32, #tpu.memory_space<vmem>>, vector<1x4x8x8xf32>,
    %155 = arith.truncf %151 : vector<4x8x8xf32> to vector<4x8x8xbf16>
    %156 = arith.truncf %133 : vector<4x8x8xf32> to vector<4x8x8xbf16>
    %cst_65 = arith.constant dense<0.000000e+00> : vector<4x8x8xf32>
    %157 = tpu.matmul %155, %156, %cst_65 {dimension_numbers = #tpu.dot_dimension_numbers<[2], [1], [1], [2], [0, 0, 0, 1, 1, 2], [0], [0]>} : vector<4x8x8xbf16>, vector<4x8x8xbf16>, vector<4x8x8xf32> -> vector<4x8x8xf32>
    %158 = arith.truncf %157 : vector<4x8x8xf32> to vector<4x8x8xbf16>
    %c0_66 = arith.constant 0 : index
    %c0_67 = arith.constant 0 : index
    %c0_68 = arith.constant 0 : index
    %159 = vector.load %arg11[%c0_66, %c0_67, %c0_68] : memref<4x8x32xbf16, #tpu.memory_space<vmem>>, vector<4x8x32xbf16>
    %cst_69 = arith.constant dense<0.000000e+00> : vector<4x8x32xf32>
    %160 = tpu.matmul %158, %159, %cst_69 {dimension_numbers = #tpu.dot_dimension_numbers<[2], [1], [1], [2], [0, 0, 0, 1, 1, 2], [0], [0]>} : vector<4x8x8xbf16>, vector<4x8x32xbf16>, vector<4x8x32xf32> -> vector<4x8x32xf32>
    %cst_70 = arith.constant dense<0.000000e+00> : vector<8x32xf32>
    %161 = vector.multi_reduction <add>, %160, %cst_70 [0] : vector<4x8x32xf32> to vector<8x32xf32>
    %c0_71 = arith.constant 0 : index
    %c0_72 = arith.constant 0 : index
    %162 = vector.load %arg12[%c0_71, %c0_72] : memref<1x32xf32, #tpu.memory_space<vmem>>, vector<1x32xf32>
    %163 = vector.shape_cast %162 : vector<1x32xf32> to vector<32xf32>
    %164 = vector.shape_cast %163 : vector<32xf32> to vector<1x32xf32>
    %165 = vector.broadcast %164 : vector<1x32xf32> to vector<8x32xf32>
    %166 = arith.addf %161, %165 : vector<8x32xf32>
    %167 = arith.addf %102, %166 : vector<8x32xf32>
    %cst_73 = arith.constant dense<0.000000e+00> : vector<8xf32>
    %168 = vector.multi_reduction <add>, %167, %cst_73 [1] : vector<8x32xf32> to vector<8xf32>
    %169 = vector.shape_cast %168 : vector<8xf32> to vector<8x1xf32>
    %cst_74 = arith.constant 3.200000e+01 : f32
    %170 = vector.broadcast %cst_74 : f32 to vector<8x1xf32>
    %171 = arith.divf %169, %170 : vector<8x1xf32>
    %172 = vector.broadcast %171 : vector<8x1xf32> to vector<8x32xf32>
    %173 = arith.subf %167, %172 : vector<8x32xf32>
    %174 = arith.mulf %173, %173 : vector<8x32xf32>
    %cst_75 = arith.constant dense<0.000000e+00> : vector<8xf32>
    %175 = vector.multi_reduction <add>, %174, %cst_75 [1] : vector<8x32xf32> to vector<8xf32>
    %176 = vector.shape_cast %175 : vector<8xf32> to vector<8x1xf32>
    %cst_76 = arith.constant 3.200000e+01 : f32
    %177 = vector.broadcast %cst_76 : f32 to vector<8x1xf32>
    %178 = arith.divf %176, %177 : vector<8x1xf32>
    %179 = vector.broadcast %171 : vector<8x1xf32> to vector<8x32xf32>
    %180 = arith.subf %167, %179 : vector<8x32xf32>
    %cst_77 = arith.constant 9.99999974E-6 : f32
    %181 = vector.broadcast %cst_77 : f32 to vector<8x1xf32>
    %182 = arith.addf %178, %181 : vector<8x1xf32>
    %183 = math.rsqrt %182 : vector<8x1xf32>
    %184 = vector.broadcast %183 : vector<8x1xf32> to vector<8x32xf32>
    %185 = arith.mulf %180, %184 : vector<8x32xf32>
    %186 = vector.extract_strided_slice %8 {offsets = [1, 0], sizes = [1, 32], strides = [1, 1]} : vector<3x32xf32> to vector<1x32xf32>
    %187 = vector.shape_cast %186 : vector<1x32xf32> to vector<32xf32>
    %188 = vector.shape_cast %187 : vector<32xf32> to vector<1x32xf32>
    %189 = vector.broadcast %188 : vector<1x32xf32> to vector<8x32xf32>
    %190 = arith.mulf %185, %189 : vector<8x32xf32>
    %191 = vector.extract_strided_slice %9 {offsets = [1, 0], sizes = [1, 32], strides = [1, 1]} : vector<3x32xf32> to vector<1x32xf32>
    %192 = vector.shape_cast %191 : vector<1x32xf32> to vector<32xf32>
    %193 = vector.shape_cast %192 : vector<32xf32> to vector<1x32xf32>
    %194 = vector.broadcast %193 : vector<1x32xf32> to vector<8x32xf32>
    %195 = arith.addf %190, %194 : vector<8x32xf32>
    %196 = arith.truncf %195 : vector<8x32xf32> to vector<8x32xbf16>
    %c0_78 = arith.constant 0 : index
    %c0_79 = arith.constant 0 : index
    %197 = vector.load %arg15[%c0_78, %c0_79] : memref<32x64xbf16, #tpu.memory_space<vmem>>, vector<32x64xbf16>
    %cst_80 = arith.constant dense<0.000000e+00> : vector<8x64xf32>
    %198 = tpu.matmul %196, %197, %cst_80 {dimension_numbers = #tpu.dot_dimension_numbers<[1], [0], [0], [1], [0, 0, 1, 1], [], []>} : vector<8x32xbf16>, vector<32x64xbf16>, vector<8x64xf32> -> vector<8x64xf32>
    %c0_81 = arith.constant 0 : index
    %c0_82 = arith.constant 0 : index
    %199 = vector.load %arg16[%c0_81, %c0_82] : memref<1x64xf32, #tpu.memory_space<vmem>>, vector<1x64xf32>
    %200 = vector.shape_cast %199 : vector<1x64xf32> to vector<64xf32>
    %201 = vector.shape_cast %200 : vector<64xf32> to vector<1x64xf32>
    %202 = vector.broadcast %201 : vector<1x64xf32> to vector<8x64xf32>
    %203 = arith.addf %198, %202 : vector<8x64xf32>
    %cst_83 = arith.constant 0.000000e+00 : f32
    %204 = vector.broadcast %cst_83 : f32 to vector<8x64xf32>
    %205 = arith.maximumf %203, %204 : vector<8x64xf32>
    %206 = arith.truncf %205 : vector<8x64xf32> to vector<8x64xbf16>
    %c0_84 = arith.constant 0 : index
    %c0_85 = arith.constant 0 : index
    %207 = vector.load %arg17[%c0_84, %c0_85] : memref<64x32xbf16, #tpu.memory_space<vmem>>, vector<64x32xbf16>
    %cst_86 = arith.constant dense<0.000000e+00> : vector<8x32xf32>
    %208 = tpu.matmul %206, %207, %cst_86 {dimension_numbers = #tpu.dot_dimension_numbers<[1], [0], [0], [1], [0, 0, 1, 1], [], []>} : vector<8x64xbf16>, vector<64x32xbf16>, vector<8x32xf32> -> vector<8x32xf32>
    %c0_87 = arith.constant 0 : index
    %c0_88 = arith.constant 0 : index
    %209 = vector.load %arg18[%c0_87, %c0_88] : memref<1x32xf32, #tpu.memory_space<vmem>>, vector<1x32xf32>
    %210 = vector.shape_cast %209 : vector<1x32xf32> to vector<32xf32>
    %211 = vector.shape_cast %210 : vector<32xf32> to vector<1x32xf32>
    %212 = vector.broadcast %211 : vector<1x32xf32> to vector<8x32xf32>
    %213 = arith.addf %208, %212 : vector<8x32xf32>
    %214 = arith.addf %195, %213 : vector<8x32xf32>
    %cst_89 = arith.constant dense<0.000000e+00> : vector<8xf32>
    %215 = vector.multi_reduction <add>, %214, %cst_89 [1] : vector<8x32xf32> to vector<8xf32>
    %216 = vector.shape_cast %215 : vector<8xf32> to vector<8x1xf32>
    %cst_90 = arith.constant 3.200000e+01 : f32
    %217 = vector.broadcast %cst_90 : f32 to vector<8x1xf32>
    %218 = arith.divf %216, %217 : vector<8x1xf32>
    %219 = vector.broadcast %218 : vector<8x1xf32> to vector<8x32xf32>
    %220 = arith.subf %214, %219 : vector<8x32xf32>
    %221 = arith.mulf %220, %220 : vector<8x32xf32>
    %cst_91 = arith.constant dense<0.000000e+00> : vector<8xf32>
    %222 = vector.multi_reduction <add>, %221, %cst_91 [1] : vector<8x32xf32> to vector<8xf32>
    %223 = vector.shape_cast %222 : vector<8xf32> to vector<8x1xf32>
    %cst_92 = arith.constant 3.200000e+01 : f32
    %224 = vector.broadcast %cst_92 : f32 to vector<8x1xf32>
    %225 = arith.divf %223, %224 : vector<8x1xf32>
    %226 = vector.broadcast %218 : vector<8x1xf32> to vector<8x32xf32>
    %227 = arith.subf %214, %226 : vector<8x32xf32>
    %cst_93 = arith.constant 9.99999974E-6 : f32
    %228 = vector.broadcast %cst_93 : f32 to vector<8x1xf32>
    %229 = arith.addf %225, %228 : vector<8x1xf32>
    %230 = math.rsqrt %229 : vector<8x1xf32>
    %231 = vector.broadcast %230 : vector<8x1xf32> to vector<8x32xf32>
    %232 = arith.mulf %227, %231 : vector<8x32xf32>
    %233 = vector.extract_strided_slice %8 {offsets = [2, 0], sizes = [1, 32], strides = [1, 1]} : vector<3x32xf32> to vector<1x32xf32>
    %234 = vector.shape_cast %233 : vector<1x32xf32> to vector<32xf32>
    %235 = vector.shape_cast %234 : vector<32xf32> to vector<1x32xf32>
    %236 = vector.broadcast %235 : vector<1x32xf32> to vector<8x32xf32>
    %237 = arith.mulf %232, %236 : vector<8x32xf32>
    %238 = vector.extract_strided_slice %9 {offsets = [2, 0], sizes = [1, 32], strides = [1, 1]} : vector<3x32xf32> to vector<1x32xf32>
    %239 = vector.shape_cast %238 : vector<1x32xf32> to vector<32xf32>
    %240 = vector.shape_cast %239 : vector<32xf32> to vector<1x32xf32>
    %241 = vector.broadcast %240 : vector<1x32xf32> to vector<8x32xf32>
    %242 = arith.addf %237, %241 : vector<8x32xf32>
    %c0_94 = arith.constant 0 : index
    %c0_95 = arith.constant 0 : index
    %c0_96 = arith.constant 0 : index
    %243 = vector.load %arg19[%c0_94, %c0_95, %c0_96] : memref<1x8x32xf32, #tpu.memory_space<vmem>>, vector<1x8x32xf32>
    %244 = vector.shape_cast %243 : vector<1x8x32xf32> to vector<8x32xf32>
    %245 = vector.shape_cast %242 : vector<8x32xf32> to vector<1x8x32xf32>
    tpu.vector_store %arg19[%c0_94, %c0_95, %c0_96], %245 {strides = array<i32>} : memref<1x8x32xf32, #tpu.memory_space<vmem>>, vector<1x8x32xf32>,
    return
  }
  func.func @transform_0(%arg0: i32) -> (i32, i32, i32) {
    %c0_i32 = arith.constant 0 : i32
    %c0_i32_0 = arith.constant 0 : i32
    %c0_i32_1 = arith.constant 0 : i32
    return %arg0, %c0_i32, %c0_i32_0 : i32, i32, i32
  }
  func.func @transform_1(%arg0: i32) -> (i32, i32, i32) {
    %c0_i32 = arith.constant 0 : i32
    %c0_i32_0 = arith.constant 0 : i32
    %c0_i32_1 = arith.constant 0 : i32
    return %arg0, %c0_i32, %c0_i32_0 : i32, i32, i32
  }
  func.func @transform_2(%arg0: i32) -> (i32, i32, i32) {
    %c0_i32 = arith.constant 0 : i32
    %c0_i32_0 = arith.constant 0 : i32
    %c0_i32_1 = arith.constant 0 : i32
    return %arg0, %c0_i32, %c0_i32_0 : i32, i32, i32
  }
  func.func @transform_3(%arg0: i32) -> (i32, i32, i32) {
    %c0_i32 = arith.constant 0 : i32
    %c0_i32_0 = arith.constant 0 : i32
    %c0_i32_1 = arith.constant 0 : i32
    return %arg0, %c0_i32, %c0_i32_0 : i32, i32, i32
  }
  func.func @transform_4(%arg0: i32) -> (i32, i32, i32, i32) {
    %c0_i32 = arith.constant 0 : i32
    %c0_i32_0 = arith.constant 0 : i32
    %c0_i32_1 = arith.constant 0 : i32
    %c0_i32_2 = arith.constant 0 : i32
    %c0_i32_3 = arith.constant 0 : i32
    return %c0_i32, %c0_i32_0, %c0_i32_1, %c0_i32_2 : i32, i32, i32, i32
  }
  func.func @transform_5(%arg0: i32) -> (i32, i32, i32, i32) {
    %c0_i32 = arith.constant 0 : i32
    %c0_i32_0 = arith.constant 0 : i32
    %c0_i32_1 = arith.constant 0 : i32
    %c0_i32_2 = arith.constant 0 : i32
    %c0_i32_3 = arith.constant 0 : i32
    return %c0_i32, %c0_i32_0, %c0_i32_1, %c0_i32_2 : i32, i32, i32, i32
  }
  func.func @transform_6(%arg0: i32) -> (i32, i32, i32) {
    %c0_i32 = arith.constant 0 : i32
    %c0_i32_0 = arith.constant 0 : i32
    %c0_i32_1 = arith.constant 0 : i32
    %c0_i32_2 = arith.constant 0 : i32
    return %c0_i32, %c0_i32_0, %c0_i32_1 : i32, i32, i32
  }
  func.func @transform_7(%arg0: i32) -> (i32, i32) {
    %c0_i32 = arith.constant 0 : i32
    %c0_i32_0 = arith.constant 0 : i32
    %c0_i32_1 = arith.constant 0 : i32
    return %c0_i32, %c0_i32_0 : i32, i32
  }
  func.func @transform_8(%arg0: i32) -> (i32, i32, i32, i32) {
    %c0_i32 = arith.constant 0 : i32
    %c0_i32_0 = arith.constant 0 : i32
    %c0_i32_1 = arith.constant 0 : i32
    %c0_i32_2 = arith.constant 0 : i32
    %c0_i32_3 = arith.constant 0 : i32
    return %c0_i32, %c0_i32_0, %c0_i32_1, %c0_i32_2 : i32, i32, i32, i32
  }
  func.func @transform_9(%arg0: i32) -> (i32, i32, i32, i32) {
    %c0_i32 = arith.constant 0 : i32
    %c0_i32_0 = arith.constant 0 : i32
    %c0_i32_1 = arith.constant 0 : i32
    %c0_i32_2 = arith.constant 0 : i32
    %c0_i32_3 = arith.constant 0 : i32
    return %c0_i32, %c0_i32_0, %c0_i32_1, %c0_i32_2 : i32, i32, i32, i32
  }
  func.func @transform_10(%arg0: i32) -> (i32, i32, i32) {
    %c0_i32 = arith.constant 0 : i32
    %c0_i32_0 = arith.constant 0 : i32
    %c0_i32_1 = arith.constant 0 : i32
    %c0_i32_2 = arith.constant 0 : i32
    return %c0_i32, %c0_i32_0, %c0_i32_1 : i32, i32, i32
  }
  func.func @transform_11(%arg0: i32) -> (i32, i32) {
    %c0_i32 = arith.constant 0 : i32
    %c0_i32_0 = arith.constant 0 : i32
    %c0_i32_1 = arith.constant 0 : i32
    return %c0_i32, %c0_i32_0 : i32, i32
  }
  func.func @transform_12(%arg0: i32) -> (i32, i32) {
    %c0_i32 = arith.constant 0 : i32
    %c0_i32_0 = arith.constant 0 : i32
    %c0_i32_1 = arith.constant 0 : i32
    return %c0_i32, %c0_i32_0 : i32, i32
  }
  func.func @transform_13(%arg0: i32) -> (i32, i32) {
    %c0_i32 = arith.constant 0 : i32
    %c0_i32_0 = arith.constant 0 : i32
    %c0_i32_1 = arith.constant 0 : i32
    return %c0_i32, %c0_i32_0 : i32, i32
  }
  func.func @transform_14(%arg0: i32) -> (i32, i32) {
    %c0_i32 = arith.constant 0 : i32
    %c0_i32_0 = arith.constant 0 : i32
    %c0_i32_1 = arith.constant 0 : i32
    return %c0_i32, %c0_i32_0 : i32, i32
  }
  func.func @transform_15(%arg0: i32) -> (i32, i32) {
    %c0_i32 = arith.constant 0 : i32
    %c0_i32_0 = arith.constant 0 : i32
    %c0_i32_1 = arith.constant 0 : i32
    return %c0_i32, %c0_i32_0 : i32, i32
  }
  func.func @transform_16(%arg0: i32) -> (i32, i32) {
    %c0_i32 = arith.constant 0 : i32
    %c0_i32_0 = arith.constant 0 : i32
    %c0_i32_1 = arith.constant 0 : i32
    return %c0_i32, %c0_i32_0 : i32, i32
  }
  func.func @transform_17(%arg0: i32) -> (i32, i32) {
    %c0_i32 = arith.constant 0 : i32
    %c0_i32_0 = arith.constant 0 : i32
    %c0_i32_1 = arith.constant 0 : i32
    return %c0_i32, %c0_i32_0 : i32, i32
  }
  func.func @transform_18(%arg0: i32) -> (i32, i32, i32) {
    %c0_i32 = arith.constant 0 : i32
    %c0_i32_0 = arith.constant 0 : i32
    %c0_i32_1 = arith.constant 0 : i32
    return %arg0, %c0_i32, %c0_i32_0 : i32, i32, i32
  }
  func.func @transform_19(%arg0: i32) -> (i32, i32, i32, i32) {
    %c0_i32 = arith.constant 0 : i32
    %c0_i32_0 = arith.constant 0 : i32
    %c0_i32_1 = arith.constant 0 : i32
    %c0_i32_2 = arith.constant 0 : i32
    return %arg0, %c0_i32, %c0_i32_0, %c0_i32_1 : i32, i32, i32, i32
  }
  func.func @transform_20(%arg0: i32) -> (i32, i32, i32, i32) {
    %c0_i32 = arith.constant 0 : i32
    %c0_i32_0 = arith.constant 0 : i32
    %c0_i32_1 = arith.constant 0 : i32
    %c0_i32_2 = arith.constant 0 : i32
    return %arg0, %c0_i32, %c0_i32_0, %c0_i32_1 : i32, i32, i32, i32
  }
}

</mosaic_0001>

<llo_original>
// kernel: tpu_custom_call.1
$region0: #{tpu_custom_call.1}
  #allocation0 [shape = 'u32[]', space=smem, size = 0x4, offset = 0x4, fixed_abs, tag = 'smem constant byte address 0x4 - core index']
  #allocation1 [shape = 'u32[72,128]{1,0:T(1,128)}', space=vmem, size = 0x9000, scoped, tag = 'internal scratch']
  %s0 = inlined_call_operand.vmem [shape: f32[2,8,32], index: 0, kind: input, shape index: {}]
  %s1 = inlined_call_operand.vmem [shape: f32[2,8,32], index: 1, kind: input, shape index: {}]
  %s2 = inlined_call_operand.vmem [shape: f32[2,8,8], index: 2, kind: input, shape index: {}]
  %s3 = inlined_call_operand.vmem [shape: f32[2,8,8], index: 3, kind: input, shape index: {}]
  %s4 = inlined_call_operand.vmem [shape: bf16[3,4,32,8], index: 4, kind: input, shape index: {}]
  %s5 = inlined_call_operand.vmem [shape: f32[3,4,1,8], index: 5, kind: input, shape index: {}]
  %s6 = inlined_call_operand.vmem [shape: bf16[4,8,32], index: 6, kind: input, shape index: {}]
  %s7 = inlined_call_operand.vmem [shape: f32[1,32], index: 7, kind: input, shape index: {}]
  %s8 = inlined_call_operand.vmem [shape: bf16[3,4,32,8], index: 8, kind: input, shape index: {}]
  %s9 = inlined_call_operand.vmem [shape: f32[3,4,1,8], index: 9, kind: input, shape index: {}]
  %s10 = inlined_call_operand.vmem [shape: bf16[4,8,32], index: 10, kind: input, shape index: {}]
  %s11 = inlined_call_operand.vmem [shape: f32[1,32], index: 11, kind: input, shape index: {}]
  %s12 = inlined_call_operand.vmem [shape: f32[3,32], index: 12, kind: input, shape index: {}]
  %s13 = inlined_call_operand.vmem [shape: f32[3,32], index: 13, kind: input, shape index: {}]
  %s14 = inlined_call_operand.vmem [shape: bf16[32,64], index: 14, kind: input, shape index: {}]
  %s15 = inlined_call_operand.vmem [shape: f32[1,64], index: 15, kind: input, shape index: {}]
  %s16 = inlined_call_operand.vmem [shape: bf16[64,32], index: 16, kind: input, shape index: {}]
  %s17 = inlined_call_operand.vmem [shape: f32[1,32], index: 17, kind: input, shape index: {}]
  %s18 = inlined_call_operand.hbm [shape: f32[2,8,32], index: 18, kind: output, shape index: {0}]
  %s19 = inlined_call_operand.hbm [shape: f32[2,4,8,8], index: 19, kind: output, shape index: {1}]
  %s20 = inlined_call_operand.hbm [shape: f32[2,4,8,8], index: 20, kind: output, shape index: {2}]
  %21 = xla_tuple %s18, %s19, %s20
  %s22 = sld [smem:[#allocation0]]
  $region121: #{tpu_custom_call.1} parent=0
    _
  %s24 = ssub.s32 1, %s22
  %s25 = scalar_select 0, %s24, %s22
  $region1: #{tpu_custom_call.1} parent=0
    #allocation2 [shape = 'u8[8192]{0}', space=vmem, size = 0x2000, scoped, tag = 'output window, operand 0']
    #allocation3 [shape = 's32[2]{0}', space=sflag, size = 0x8, scoped, tag = 'scoped memory for tpu_custom_call.1']
    #allocation4 [shape = 'u8[32768]{0}', space=vmem, size = 0x8000, scoped, tag = 'output window, operand 1']
    #allocation5 [shape = 's32[2]{0}', space=sflag, size = 0x8, scoped, tag = 'scoped memory for tpu_custom_call.1']
    #allocation6 [shape = 'u8[32768]{0}', space=vmem, size = 0x8000, scoped, tag = 'output window, operand 2']
    %26 = vsyncpa [#allocation3], 0
    %s27 = scalar_lea.sflag [#allocation3], 1
    %28 = vsyncpa %s27, 0
    %29 = vsyncpa [#allocation5], 0
    %s30 = scalar_lea.sflag [#allocation5], 1
    %31 = vsyncpa %s30, 0
    loop: start=0, step=1, limit=4
    $region2: #{tpu_custom_call.1} parent=1 // loop_pre_header
      _
    $region3: #{tpu_custom_call.1} parent=1 // loop_header
      %s33 = sphi 0, %s37
      %p34 = scmp.ge.s32.totalorder %s33, 4
      %s43 = sphi 0, %s45
      %s46 = sphi 0, %s43
      %s47 = sphi 0, %s46
      %s63 = sphi 0, %s47
      %s69 = sphi 0, %s71
      %s72 = sphi 0, %s69
      %s73 = sphi 0, %s72
      %s89 = sphi 0, %s73
      %s95 = sphi 0, %s97
      %s98 = sphi 0, %s95
      %s99 = sphi 0, %s98
      %s115 = sphi 0, %s99
      %s121 = sphi 0, %s123
      %s124 = sphi 0, %s121
      %s125 = sphi 0, %s124
      %s141 = sphi 0, %s125
      %s145 = sphi 0, %s145
      %s147 = sphi 0, %s145
      %s148 = sphi 0, %s147
      %s162 = sphi 0, %s148
      %s166 = sphi 0, %s166
      %s168 = sphi 0, %s166
      %s169 = sphi 0, %s168
      %s183 = sphi 0, %s169
      %s187 = sphi 0, %s187
      %s189 = sphi 0, %s187
      %s190 = sphi 0, %s189
      %s204 = sphi 0, %s190
      %s208 = sphi 0, %s208
      %s210 = sphi 0, %s208
      %s211 = sphi 0, %s210
      %s225 = sphi 0, %s211
      %s229 = sphi 0, %s229
      %s231 = sphi 0, %s229
      %s232 = sphi 0, %s231
      %s246 = sphi 0, %s232
      %s250 = sphi 0, %s250
      %s252 = sphi 0, %s250
      %s253 = sphi 0, %s252
      %s267 = sphi 0, %s253
      %s271 = sphi 0, %s271
      %s273 = sphi 0, %s271
      %s274 = sphi 0, %s273
      %s288 = sphi 0, %s274
      %s292 = sphi 0, %s292
      %s294 = sphi 0, %s292
      %s295 = sphi 0, %s294
      %s309 = sphi 0, %s295
      %s313 = sphi 0, %s313
      %s315 = sphi 0, %s313
      %s316 = sphi 0, %s315
      %s330 = sphi 0, %s316
      %s334 = sphi 0, %s334
      %s336 = sphi 0, %s334
      %s337 = sphi 0, %s336
      %s351 = sphi 0, %s337
      %s355 = sphi 0, %s355
      %s357 = sphi 0, %s355
      %s358 = sphi 0, %s357
      %s372 = sphi 0, %s358
      %s376 = sphi 0, %s376
      %s378 = sphi 0, %s376
      %s379 = sphi 0, %s378
      %s393 = sphi 0, %s379
      %s397 = sphi 0, %s397
      %s399 = sphi 0, %s397
      %s400 = sphi 0, %s399
      %s414 = sphi 0, %s400
      %s418 = sphi 0, %s418
      %s420 = sphi 0, %s418
      %s421 = sphi 0, %s420
      %s435 = sphi 0, %s421
      %s441 = sphi 0, %s443
      %s444 = sphi 0, %s441
      %s445 = sphi 0, %s444
      %s461 = sphi 0, %s445
      %s467 = sphi 0, %s469
      %s470 = sphi 0, %s467
      %s471 = sphi 0, %s470
      %s487 = sphi 0, %s471
      %s493 = sphi 0, %s495
      %s496 = sphi 0, %s493
      %s497 = sphi 0, %s496
      %s513 = sphi 0, %s497
    $region4: #{tpu_custom_call.1} parent=1 // loop_header_branch
      %36 = sbr.rel (%p34) target = $region8
    $region5: #{tpu_custom_call.1} parent=1 // loop_body
      %s38 = ssub.s32 %s33, 1
      %s39 = ssub.s32 %s33, 2
      %s40 = sadd.s32 %s33, 1
      %s41 = ssub.s32 %s33, %s40
      %p42 = scmp.eq.s32.totalorder %s41, 0
      %s44 = sadd.s32 %s43, 1
      %s45 = scalar_select %p42, %s43, %s44
      %p48 = pneg %p42
      %p49 = scmp.eq.s32.totalorder %s33, 1
      %p50 = por %p48, %p49
      %p51 = scmp.ne.s32.totalorder %s43, %s46
      %p52 = scmp.eq.s32.totalorder %s33, 0
      %p53 = por %p51, %p52
      %p54 = scmp.ne.s32.totalorder %s43, %s46
      %p55 = scmp.eq.s32.totalorder %s38, 1
      %p56 = por %p54, %p55
      %p57 = scmp.ne.s32.totalorder %s46, %s47
      %p58 = scmp.eq.s32.totalorder %s38, 0
      %p59 = por %p57, %p58
      %p60 = scmp.ne.s32.totalorder %s46, %s47
      %p61 = scmp.eq.s32.totalorder %s39, 1
      %p62 = por %p60, %p61
      %p64 = scmp.ne.s32.totalorder %s47, %s63
      %p65 = scmp.eq.s32.totalorder %s39, 0
      %p66 = por %p64, %p65
      %s67 = ssub.s32 %s33, %s40
      %p68 = scmp.eq.s32.totalorder %s67, 0
      %s70 = sadd.s32 %s69, 1
      %s71 = scalar_select %p68, %s69, %s70
      %p74 = pneg %p68
      %p75 = scmp.eq.s32.totalorder %s33, 1
      %p76 = por %p74, %p75
      %p77 = scmp.ne.s32.totalorder %s69, %s72
      %p78 = scmp.eq.s32.totalorder %s33, 0
      %p79 = por %p77, %p78
      %p80 = scmp.ne.s32.totalorder %s69, %s72
      %p81 = scmp.eq.s32.totalorder %s38, 1
      %p82 = por %p80, %p81
      %p83 = scmp.ne.s32.totalorder %s72, %s73
      %p84 = scmp.eq.s32.totalorder %s38, 0
      %p85 = por %p83, %p84
      %p86 = scmp.ne.s32.totalorder %s72, %s73
      %p87 = scmp.eq.s32.totalorder %s39, 1
      %p88 = por %p86, %p87
      %p90 = scmp.ne.s32.totalorder %s73, %s89
      %p91 = scmp.eq.s32.totalorder %s39, 0
      %p92 = por %p90, %p91
      %s93 = ssub.s32 %s33, %s40
      %p94 = scmp.eq.s32.totalorder %s93, 0
      %s96 = sadd.s32 %s95, 1
      %s97 = scalar_select %p94, %s95, %s96
      %p100 = pneg %p94
      %p101 = scmp.eq.s32.totalorder %s33, 1
      %p102 = por %p100, %p101
      %p103 = scmp.ne.s32.totalorder %s95, %s98
      %p104 = scmp.eq.s32.totalorder %s33, 0
      %p105 = por %p103, %p104
      %p106 = scmp.ne.s32.totalorder %s95, %s98
      %p107 = scmp.eq.s32.totalorder %s38, 1
      %p108 = por %p106, %p107
      %p109 = scmp.ne.s32.totalorder %s98, %s99
      %p110 = scmp.eq.s32.totalorder %s38, 0
      %p111 = por %p109, %p110
      %p112 = scmp.ne.s32.totalorder %s98, %s99
      %p113 = scmp.eq.s32.totalorder %s39, 1
      %p114 = por %p112, %p113
      %p116 = scmp.ne.s32.totalorder %s99, %s115
      %p117 = scmp.eq.s32.totalorder %s39, 0
      %p118 = por %p116, %p117
      %s119 = ssub.s32 %s33, %s40
      %p120 = scmp.eq.s32.totalorder %s119, 0
      %s122 = sadd.s32 %s121, 1
      %s123 = scalar_select %p120, %s121, %s122
      %p126 = pneg %p120
      %p127 = scmp.eq.s32.totalorder %s33, 1
      %p128 = por %p126, %p127
      %p129 = scmp.ne.s32.totalorder %s121, %s124
      %p130 = scmp.eq.s32.totalorder %s33, 0
      %p131 = por %p129, %p130
      %p132 = scmp.ne.s32.totalorder %s121, %s124
      %p133 = scmp.eq.s32.totalorder %s38, 1
      %p134 = por %p132, %p133
      %p135 = scmp.ne.s32.totalorder %s124, %s125
      %p136 = scmp.eq.s32.totalorder %s38, 0
      %p137 = por %p135, %p136
      %p138 = scmp.ne.s32.totalorder %s124, %s125
      %p139 = scmp.eq.s32.totalorder %s39, 1
      %p140 = por %p138, %p139
      %p142 = scmp.ne.s32.totalorder %s125, %s141
      %p143 = scmp.eq.s32.totalorder %s39, 0
      %p144 = por %p142, %p143
      %s146 = sadd.s32 %s145, 1
      %p149 = scmp.eq.s32.totalorder %s33, 1
      %p150 = scmp.ne.s32.totalorder %s145, %s147
      %p151 = scmp.eq.s32.totalorder %s33, 0
      %p152 = por %p150, %p151
      %p153 = scmp.ne.s32.totalorder %s145, %s147
      %p154 = scmp.eq.s32.totalorder %s38, 1
      %p155 = por %p153, %p154
      %p156 = scmp.ne.s32.totalorder %s147, %s148
      %p157 = scmp.eq.s32.totalorder %s38, 0
      %p158 = por %p156, %p157
      %p159 = scmp.ne.s32.totalorder %s147, %s148
      %p160 = scmp.eq.s32.totalorder %s39, 1
      %p161 = por %p159, %p160
      %p163 = scmp.ne.s32.totalorder %s148, %s162
      %p164 = scmp.eq.s32.totalorder %s39, 0
      %p165 = por %p163, %p164
      %s167 = sadd.s32 %s166, 1
      %p170 = scmp.eq.s32.totalorder %s33, 1
      %p171 = scmp.ne.s32.totalorder %s166, %s168
      %p172 = scmp.eq.s32.totalorder %s33, 0
      %p173 = por %p171, %p172
      %p174 = scmp.ne.s32.totalorder %s166, %s168
      %p175 = scmp.eq.s32.totalorder %s38, 1
      %p176 = por %p174, %p175
      %p177 = scmp.ne.s32.totalorder %s168, %s169
      %p178 = scmp.eq.s32.totalorder %s38, 0
      %p179 = por %p177, %p178
      %p180 = scmp.ne.s32.totalorder %s168, %s169
      %p181 = scmp.eq.s32.totalorder %s39, 1
      %p182 = por %p180, %p181
      %p184 = scmp.ne.s32.totalorder %s169, %s183
      %p185 = scmp.eq.s32.totalorder %s39, 0
      %p186 = por %p184, %p185
      %s188 = sadd.s32 %s187, 1
      %p191 = scmp.eq.s32.totalorder %s33, 1
      %p192 = scmp.ne.s32.totalorder %s187, %s189
      %p193 = scmp.eq.s32.totalorder %s33, 0
      %p194 = por %p192, %p193
      %p195 = scmp.ne.s32.totalorder %s187, %s189
      %p196 = scmp.eq.s32.totalorder %s38, 1
      %p197 = por %p195, %p196
      %p198 = scmp.ne.s32.totalorder %s189, %s190
      %p199 = scmp.eq.s32.totalorder %s38, 0
      %p200 = por %p198, %p199
      %p201 = scmp.ne.s32.totalorder %s189, %s190
      %p202 = scmp.eq.s32.totalorder %s39, 1
      %p203 = por %p201, %p202
      %p205 = scmp.ne.s32.totalorder %s190, %s204
      %p206 = scmp.eq.s32.totalorder %s39, 0
      %p207 = por %p205, %p206
      %s209 = sadd.s32 %s208, 1
      %p212 = scmp.eq.s32.totalorder %s33, 1
      %p213 = scmp.ne.s32.totalorder %s208, %s210
      %p214 = scmp.eq.s32.totalorder %s33, 0
      %p215 = por %p213, %p214
      %p216 = scmp.ne.s32.totalorder %s208, %s210
      %p217 = scmp.eq.s32.totalorder %s38, 1
      %p218 = por %p216, %p217
      %p219 = scmp.ne.s32.totalorder %s210, %s211
      %p220 = scmp.eq.s32.totalorder %s38, 0
      %p221 = por %p219, %p220
      %p222 = scmp.ne.s32.totalorder %s210, %s211
      %p223 = scmp.eq.s32.totalorder %s39, 1
      %p224 = por %p222, %p223
      %p226 = scmp.ne.s32.totalorder %s211, %s225
      %p227 = scmp.eq.s32.totalorder %s39, 0
      %p228 = por %p226, %p227
      %s230 = sadd.s32 %s229, 1
      %p233 = scmp.eq.s32.totalorder %s33, 1
      %p234 = scmp.ne.s32.totalorder %s229, %s231
      %p235 = scmp.eq.s32.totalorder %s33, 0
      %p236 = por %p234, %p235
      %p237 = scmp.ne.s32.totalorder %s229, %s231
      %p238 = scmp.eq.s32.totalorder %s38, 1
      %p239 = por %p237, %p238
      %p240 = scmp.ne.s32.totalorder %s231, %s232
      %p241 = scmp.eq.s32.totalorder %s38, 0
      %p242 = por %p240, %p241
      %p243 = scmp.ne.s32.totalorder %s231, %s232
      %p244 = scmp.eq.s32.totalorder %s39, 1
      %p245 = por %p243, %p244
      %p247 = scmp.ne.s32.totalorder %s232, %s246
      %p248 = scmp.eq.s32.totalorder %s39, 0
      %p249 = por %p247, %p248
      %s251 = sadd.s32 %s250, 1
      %p254 = scmp.eq.s32.totalorder %s33, 1
      %p255 = scmp.ne.s32.totalorder %s250, %s252
      %p256 = scmp.eq.s32.totalorder %s33, 0
      %p257 = por %p255, %p256
      %p258 = scmp.ne.s32.totalorder %s250, %s252
      %p259 = scmp.eq.s32.totalorder %s38, 1
      %p260 = por %p258, %p259
      %p261 = scmp.ne.s32.totalorder %s252, %s253
      %p262 = scmp.eq.s32.totalorder %s38, 0
      %p263 = por %p261, %p262
      %p264 = scmp.ne.s32.totalorder %s252, %s253
      %p265 = scmp.eq.s32.totalorder %s39, 1
      %p266 = por %p264, %p265
      %p268 = scmp.ne.s32.totalorder %s253, %s267
      %p269 = scmp.eq.s32.totalorder %s39, 0
      %p270 = por %p268, %p269
      %s272 = sadd.s32 %s271, 1
      %p275 = scmp.eq.s32.totalorder %s33, 1
      %p276 = scmp.ne.s32.totalorder %s271, %s273
      %p277 = scmp.eq.s32.totalorder %s33, 0
      %p278 = por %p276, %p277
      %p279 = scmp.ne.s32.totalorder %s271, %s273
      %p280 = scmp.eq.s32.totalorder %s38, 1
      %p281 = por %p279, %p280
      %p282 = scmp.ne.s32.totalorder %s273, %s274
      %p283 = scmp.eq.s32.totalorder %s38, 0
      %p284 = por %p282, %p283
      %p285 = scmp.ne.s32.totalorder %s273, %s274
      %p286 = scmp.eq.s32.totalorder %s39, 1
      %p287 = por %p285, %p286
      %p289 = scmp.ne.s32.totalorder %s274, %s288
      %p290 = scmp.eq.s32.totalorder %s39, 0
      %p291 = por %p289, %p290
      %s293 = sadd.s32 %s292, 1
      %p296 = scmp.eq.s32.totalorder %s33, 1
      %p297 = scmp.ne.s32.totalorder %s292, %s294
      %p298 = scmp.eq.s32.totalorder %s33, 0
      %p299 = por %p297, %p298
      %p300 = scmp.ne.s32.totalorder %s292, %s294
      %p301 = scmp.eq.s32.totalorder %s38, 1
      %p302 = por %p300, %p301
      %p303 = scmp.ne.s32.totalorder %s294, %s295
      %p304 = scmp.eq.s32.totalorder %s38, 0
      %p305 = por %p303, %p304
      %p306 = scmp.ne.s32.totalorder %s294, %s295
      %p307 = scmp.eq.s32.totalorder %s39, 1
      %p308 = por %p306, %p307
      %p310 = scmp.ne.s32.totalorder %s295, %s309
      %p311 = scmp.eq.s32.totalorder %s39, 0
      %p312 = por %p310, %p311
      %s314 = sadd.s32 %s313, 1
      %p317 = scmp.eq.s32.totalorder %s33, 1
      %p318 = scmp.ne.s32.totalorder %s313, %s315
      %p319 = scmp.eq.s32.totalorder %s33, 0
      %p320 = por %p318, %p319
      %p321 = scmp.ne.s32.totalorder %s313, %s315
      %p322 = scmp.eq.s32.totalorder %s38, 1
      %p323 = por %p321, %p322
      %p324 = scmp.ne.s32.totalorder %s315, %s316
      %p325 = scmp.eq.s32.totalorder %s38, 0
      %p326 = por %p324, %p325
      %p327 = scmp.ne.s32.totalorder %s315, %s316
      %p328 = scmp.eq.s32.totalorder %s39, 1
      %p329 = por %p327, %p328
      %p331 = scmp.ne.s32.totalorder %s316, %s330
      %p332 = scmp.eq.s32.totalorder %s39, 0
      %p333 = por %p331, %p332
      %s335 = sadd.s32 %s334, 1
      %p338 = scmp.eq.s32.totalorder %s33, 1
      %p339 = scmp.ne.s32.totalorder %s334, %s336
      %p340 = scmp.eq.s32.totalorder %s33, 0
      %p341 = por %p339, %p340
      %p342 = scmp.ne.s32.totalorder %s334, %s336
      %p343 = scmp.eq.s32.totalorder %s38, 1
      %p344 = por %p342, %p343
      %p345 = scmp.ne.s32.totalorder %s336, %s337
      %p346 = scmp.eq.s32.totalorder %s38, 0
      %p347 = por %p345, %p346
      %p348 = scmp.ne.s32.totalorder %s336, %s337
      %p349 = scmp.eq.s32.totalorder %s39, 1
      %p350 = por %p348, %p349
      %p352 = scmp.ne.s32.totalorder %s337, %s351
      %p353 = scmp.eq.s32.totalorder %s39, 0
      %p354 = por %p352, %p353
      %s356 = sadd.s32 %s355, 1
      %p359 = scmp.eq.s32.totalorder %s33, 1
      %p360 = scmp.ne.s32.totalorder %s355, %s357
      %p361 = scmp.eq.s32.totalorder %s33, 0
      %p362 = por %p360, %p361
      %p363 = scmp.ne.s32.totalorder %s355, %s357
      %p364 = scmp.eq.s32.totalorder %s38, 1
      %p365 = por %p363, %p364
      %p366 = scmp.ne.s32.totalorder %s357, %s358
      %p367 = scmp.eq.s32.totalorder %s38, 0
      %p368 = por %p366, %p367
      %p369 = scmp.ne.s32.totalorder %s357, %s358
      %p370 = scmp.eq.s32.totalorder %s39, 1
      %p371 = por %p369, %p370
      %p373 = scmp.ne.s32.totalorder %s358, %s372
      %p374 = scmp.eq.s32.totalorder %s39, 0
      %p375 = por %p373, %p374
      %s377 = sadd.s32 %s376, 1
      %p380 = scmp.eq.s32.totalorder %s33, 1
      %p381 = scmp.ne.s32.totalorder %s376, %s378
      %p382 = scmp.eq.s32.totalorder %s33, 0
      %p383 = por %p381, %p382
      %p384 = scmp.ne.s32.totalorder %s376, %s378
      %p385 = scmp.eq.s32.totalorder %s38, 1
      %p386 = por %p384, %p385
      %p387 = scmp.ne.s32.totalorder %s378, %s379
      %p388 = scmp.eq.s32.totalorder %s38, 0
      %p389 = por %p387, %p388
      %p390 = scmp.ne.s32.totalorder %s378, %s379
      %p391 = scmp.eq.s32.totalorder %s39, 1
      %p392 = por %p390, %p391
      %p394 = scmp.ne.s32.totalorder %s379, %s393
      %p395 = scmp.eq.s32.totalorder %s39, 0
      %p396 = por %p394, %p395
      %s398 = sadd.s32 %s397, 1
      %p401 = scmp.eq.s32.totalorder %s33, 1
      %p402 = scmp.ne.s32.totalorder %s397, %s399
      %p403 = scmp.eq.s32.totalorder %s33, 0
      %p404 = por %p402, %p403
      %p405 = scmp.ne.s32.totalorder %s397, %s399
      %p406 = scmp.eq.s32.totalorder %s38, 1
      %p407 = por %p405, %p406
      %p408 = scmp.ne.s32.totalorder %s399, %s400
      %p409 = scmp.eq.s32.totalorder %s38, 0
      %p410 = por %p408, %p409
      %p411 = scmp.ne.s32.totalorder %s399, %s400
      %p412 = scmp.eq.s32.totalorder %s39, 1
      %p413 = por %p411, %p412
      %p415 = scmp.ne.s32.totalorder %s400, %s414
      %p416 = scmp.eq.s32.totalorder %s39, 0
      %p417 = por %p415, %p416
      %s419 = sadd.s32 %s418, 1
      %p422 = scmp.eq.s32.totalorder %s33, 1
      %p423 = scmp.ne.s32.totalorder %s418, %s420
      %p424 = scmp.eq.s32.totalorder %s33, 0
      %p425 = por %p423, %p424
      %p426 = scmp.ne.s32.totalorder %s418, %s420
      %p427 = scmp.eq.s32.totalorder %s38, 1
      %p428 = por %p426, %p427
      %p429 = scmp.ne.s32.totalorder %s420, %s421
      %p430 = scmp.eq.s32.totalorder %s38, 0
      %p431 = por %p429, %p430
      %p432 = scmp.ne.s32.totalorder %s420, %s421
      %p433 = scmp.eq.s32.totalorder %s39, 1
      %p434 = por %p432, %p433
      %p436 = scmp.ne.s32.totalorder %s421, %s435
      %p437 = scmp.eq.s32.totalorder %s39, 0
      %p438 = por %p436, %p437
      %s439 = ssub.s32 %s33, %s40
      %p440 = scmp.eq.s32.totalorder %s439, 0
      %s442 = sadd.s32 %s441, 1
      %s443 = scalar_select %p440, %s441, %s442
      %p446 = pneg %p440
      %p447 = scmp.eq.s32.totalorder %s33, 1
      %p448 = por %p446, %p447
      %p449 = scmp.ne.s32.totalorder %s441, %s444
      %p450 = scmp.eq.s32.totalorder %s33, 0
      %p451 = por %p449, %p450
      %p452 = scmp.ne.s32.totalorder %s441, %s444
      %p453 = scmp.eq.s32.totalorder %s38, 1
      %p454 = por %p452, %p453
      %p455 = scmp.ne.s32.totalorder %s444, %s445
      %p456 = scmp.eq.s32.totalorder %s38, 0
      %p457 = por %p455, %p456
      %p458 = scmp.ne.s32.totalorder %s444, %s445
      %p459 = scmp.eq.s32.totalorder %s39, 1
      %p460 = por %p458, %p459
      %p462 = scmp.ne.s32.totalorder %s445, %s461
      %p463 = scmp.eq.s32.totalorder %s39, 0
      %p464 = por %p462, %p463
      %s465 = ssub.s32 %s33, %s40
      %p466 = scmp.eq.s32.totalorder %s465, 0
      %s468 = sadd.s32 %s467, 1
      %s469 = scalar_select %p466, %s467, %s468
      %p472 = pneg %p466
      %p473 = scmp.eq.s32.totalorder %s33, 1
      %p474 = por %p472, %p473
      %p475 = scmp.ne.s32.totalorder %s467, %s470
      %p476 = scmp.eq.s32.totalorder %s33, 0
      %p477 = por %p475, %p476
      %p478 = scmp.ne.s32.totalorder %s467, %s470
      %p479 = scmp.eq.s32.totalorder %s38, 1
      %p480 = por %p478, %p479
      %p481 = scmp.ne.s32.totalorder %s470, %s471
      %p482 = scmp.eq.s32.totalorder %s38, 0
      %p483 = por %p481, %p482
      %p484 = scmp.ne.s32.totalorder %s470, %s471
      %p485 = scmp.eq.s32.totalorder %s39, 1
      %p486 = por %p484, %p485
      %p488 = scmp.ne.s32.totalorder %s471, %s487
      %p489 = scmp.eq.s32.totalorder %s39, 0
      %p490 = por %p488, %p489
      %s491 = ssub.s32 %s33, %s40
      %p492 = scmp.eq.s32.totalorder %s491, 0
      %s494 = sadd.s32 %s493, 1
      %s495 = scalar_select %p492, %s493, %s494
      %p498 = pneg %p492
      %p499 = scmp.eq.s32.totalorder %s33, 1
      %p500 = por %p498, %p499
      %p501 = scmp.ne.s32.totalorder %s493, %s496
      %p502 = scmp.eq.s32.totalorder %s33, 0
      %p503 = por %p501, %p502
      %p504 = scmp.ne.s32.totalorder %s493, %s496
      %p505 = scmp.eq.s32.totalorder %s38, 1
      %p506 = por %p504, %p505
      %p507 = scmp.ne.s32.totalorder %s496, %s497
      %p508 = scmp.eq.s32.totalorder %s38, 0
      %p509 = por %p507, %p508
      %p510 = scmp.ne.s32.totalorder %s496, %s497
      %p511 = scmp.eq.s32.totalorder %s39, 1
      %p512 = por %p510, %p511
      %p514 = scmp.ne.s32.totalorder %s497, %s513
      %p515 = scmp.eq.s32.totalorder %s39, 0
      %p516 = por %p514, %p515
      %p517 = scmp.le.s32.totalorder 1, %s33
      %p518 = scmp.lt.s32.totalorder %s33, 3
      %p519 = pnand %p517, %p518
      %p520 = pneg %p519
      // Predicated region
      $region9: #{tpu_custom_call.1} parent=5 // pred_check
        _
      $region10: #{tpu_custom_call.1} parent=5 // pred_check_branch
        %522 = sbr.rel (%p519) target = $region12
      $region11: #{tpu_custom_call.1} parent=5 // pred_region
        %s523 = ssub.s32 %s33, 1
        // Predicated region
        $region13: #{tpu_custom_call.1} parent=11 // pred_check
          %p524 = pneg %p158
        $region14: #{tpu_custom_call.1} parent=11 // pred_check_branch
          %526 = sbr.rel (%p524) target = $region16
        $region15: #{tpu_custom_call.1} parent=11 // pred_region
          _
        $region16: #{tpu_custom_call.1} parent=11 // pred_fallthru
          _
        // Predicated region
        $region17: #{tpu_custom_call.1} parent=11 // pred_check
          %p527 = pneg %p179
        $region18: #{tpu_custom_call.1} parent=11 // pred_check_branch
          %529 = sbr.rel (%p527) target = $region20
        $region19: #{tpu_custom_call.1} parent=11 // pred_region
          _
        $region20: #{tpu_custom_call.1} parent=11 // pred_fallthru
          _
        // Predicated region
        $region21: #{tpu_custom_call.1} parent=11 // pred_check
          %p530 = pneg %p200
        $region22: #{tpu_custom_call.1} parent=11 // pred_check_branch
          %532 = sbr.rel (%p530) target = $region24
        $region23: #{tpu_custom_call.1} parent=11 // pred_region
          _
        $region24: #{tpu_custom_call.1} parent=11 // pred_fallthru
          _
        // Predicated region
        $region25: #{tpu_custom_call.1} parent=11 // pred_check
          %p533 = pneg %p221
        $region26: #{tpu_custom_call.1} parent=11 // pred_check_branch
          %535 = sbr.rel (%p533) target = $region28
        $region27: #{tpu_custom_call.1} parent=11 // pred_region
          _
        $region28: #{tpu_custom_call.1} parent=11 // pred_fallthru
          _
        // Predicated region
        $region29: #{tpu_custom_call.1} parent=11 // pred_check
          %p536 = pneg %p242
        $region30: #{tpu_custom_call.1} parent=11 // pred_check_branch
          %538 = sbr.rel (%p536) target = $region32
        $region31: #{tpu_custom_call.1} parent=11 // pred_region
          _
        $region32: #{tpu_custom_call.1} parent=11 // pred_fallthru
          _
        // Predicated region
        $region33: #{tpu_custom_call.1} parent=11 // pred_check
          %p539 = pneg %p263
        $region34: #{tpu_custom_call.1} parent=11 // pred_check_branch
          %541 = sbr.rel (%p539) target = $region36
        $region35: #{tpu_custom_call.1} parent=11 // pred_region
          _
        $region36: #{tpu_custom_call.1} parent=11 // pred_fallthru
          _
        // Predicated region
        $region37: #{tpu_custom_call.1} parent=11 // pred_check
          %p542 = pneg %p284
        $region38: #{tpu_custom_call.1} parent=11 // pred_check_branch
          %544 = sbr.rel (%p542) target = $region40
        $region39: #{tpu_custom_call.1} parent=11 // pred_region
          _
        $region40: #{tpu_custom_call.1} parent=11 // pred_fallthru
          _
        // Predicated region
        $region41: #{tpu_custom_call.1} parent=11 // pred_check
          %p545 = pneg %p305
        $region42: #{tpu_custom_call.1} parent=11 // pred_check_branch
          %547 = sbr.rel (%p545) target = $region44
        $region43: #{tpu_custom_call.1} parent=11 // pred_region
          _
        $region44: #{tpu_custom_call.1} parent=11 // pred_fallthru
          _
        // Predicated region
        $region45: #{tpu_custom_call.1} parent=11 // pred_check
          %p548 = pneg %p326
        $region46: #{tpu_custom_call.1} parent=11 // pred_check_branch
          %550 = sbr.rel (%p548) target = $region48
        $region47: #{tpu_custom_call.1} parent=11 // pred_region
          _
        $region48: #{tpu_custom_call.1} parent=11 // pred_fallthru
          _
        // Predicated region
        $region49: #{tpu_custom_call.1} parent=11 // pred_check
          %p551 = pneg %p347
        $region50: #{tpu_custom_call.1} parent=11 // pred_check_branch
          %553 = sbr.rel (%p551) target = $region52
        $region51: #{tpu_custom_call.1} parent=11 // pred_region
          _
        $region52: #{tpu_custom_call.1} parent=11 // pred_fallthru
          _
        // Predicated region
        $region53: #{tpu_custom_call.1} parent=11 // pred_check
          %p554 = pneg %p368
        $region54: #{tpu_custom_call.1} parent=11 // pred_check_branch
          %556 = sbr.rel (%p554) target = $region56
        $region55: #{tpu_custom_call.1} parent=11 // pred_region
          _
        $region56: #{tpu_custom_call.1} parent=11 // pred_fallthru
          _
        // Predicated region
        $region57: #{tpu_custom_call.1} parent=11 // pred_check
          %p557 = pneg %p389
        $region58: #{tpu_custom_call.1} parent=11 // pred_check_branch
          %559 = sbr.rel (%p557) target = $region60
        $region59: #{tpu_custom_call.1} parent=11 // pred_region
          _
        $region60: #{tpu_custom_call.1} parent=11 // pred_fallthru
          _
        // Predicated region
        $region61: #{tpu_custom_call.1} parent=11 // pred_check
          %p560 = pneg %p410
        $region62: #{tpu_custom_call.1} parent=11 // pred_check_branch
          %562 = sbr.rel (%p560) target = $region64
        $region63: #{tpu_custom_call.1} parent=11 // pred_region
          _
        $region64: #{tpu_custom_call.1} parent=11 // pred_fallthru
          _
        // Predicated region
        $region65: #{tpu_custom_call.1} parent=11 // pred_check
          %p563 = pneg %p431
        $region66: #{tpu_custom_call.1} parent=11 // pred_check_branch
          %565 = sbr.rel (%p563) target = $region68
        $region67: #{tpu_custom_call.1} parent=11 // pred_region
          _
        $region68: #{tpu_custom_call.1} parent=11 // pred_fallthru
          _
      $region12: #{tpu_custom_call.1} parent=5 // pred_fallthru
        _
      %p566 = scmp.lt.s32.totalorder %s33, 2
      // Predicated region
      $region69: #{tpu_custom_call.1} parent=5 // pred_check
        %p567 = pneg %p566
      $region70: #{tpu_custom_call.1} parent=5 // pred_check_branch
        %569 = sbr.rel (%p567) target = $region72
      $region71: #{tpu_custom_call.1} parent=5 // pred_region
        // Predicated region
        $region73: #{tpu_custom_call.1} parent=71 // pred_check
          %p570 = pneg %p53
        $region74: #{tpu_custom_call.1} parent=71 // pred_check_branch
          %572 = sbr.rel (%p570) target = $region76
        $region75: #{tpu_custom_call.1} parent=71 // pred_region
          %p573 = scmp.lt.s32.totalorder %s33, 1
          %s574 = scalar_select %p573, %s33, 1
          %s575 = smul.addr %s574, 8
          %s576 = scalar_lea.vmem %s0, %s575
        $region76: #{tpu_custom_call.1} parent=71 // pred_fallthru
          _
        // Predicated region
        $region77: #{tpu_custom_call.1} parent=71 // pred_check
          %p577 = pneg %p79
        $region78: #{tpu_custom_call.1} parent=71 // pred_check_branch
          %579 = sbr.rel (%p577) target = $region80
        $region79: #{tpu_custom_call.1} parent=71 // pred_region
          %p580 = scmp.lt.s32.totalorder %s33, 1
          %s581 = scalar_select %p580, %s33, 1
          %s582 = smul.addr %s581, 8
          %s583 = scalar_lea.vmem %s1, %s582
        $region80: #{tpu_custom_call.1} parent=71 // pred_fallthru
          _
        // Predicated region
        $region81: #{tpu_custom_call.1} parent=71 // pred_check
          %p584 = pneg %p105
        $region82: #{tpu_custom_call.1} parent=71 // pred_check_branch
          %586 = sbr.rel (%p584) target = $region84
        $region83: #{tpu_custom_call.1} parent=71 // pred_region
          %p587 = scmp.lt.s32.totalorder %s33, 1
          %s588 = scalar_select %p587, %s33, 1
          %s589 = smul.addr %s588, 8
          %s590 = scalar_lea.vmem %s2, %s589
        $region84: #{tpu_custom_call.1} parent=71 // pred_fallthru
          _
        // Predicated region
        $region85: #{tpu_custom_call.1} parent=71 // pred_check
          %p591 = pneg %p131
        $region86: #{tpu_custom_call.1} parent=71 // pred_check_branch
          %593 = sbr.rel (%p591) target = $region88
        $region87: #{tpu_custom_call.1} parent=71 // pred_region
          %p594 = scmp.lt.s32.totalorder %s33, 1
          %s595 = scalar_select %p594, %s33, 1
          %s596 = smul.addr %s595, 8
          %s597 = scalar_lea.vmem %s3, %s596
        $region88: #{tpu_custom_call.1} parent=71 // pred_fallthru
          _
      $region72: #{tpu_custom_call.1} parent=5 // pred_fallthru
        _
      %p598 = scmp.le.s32.totalorder 1, %s33
      %p599 = scmp.lt.s32.totalorder %s33, 3
      %p600 = pnand %p598, %p599
      %p601 = pneg %p600
      // Predicated region
      $region89: #{tpu_custom_call.1} parent=5 // pred_check
        _
      $region90: #{tpu_custom_call.1} parent=5 // pred_check_branch
        %603 = sbr.rel (%p600) target = $region92
      $region91: #{tpu_custom_call.1} parent=5 // pred_region
        %s604 = ssub.s32 %s33, 1
        %p605 = scmp.lt.s32.totalorder %s38, 1
        %s606 = scalar_select %p605, %s38, 1
        %s607 = smul.addr %s606, 8
        %s608 = scalar_lea.vmem %s0, %s607
        %p609 = pneg %p59
        %p610 = pneg %p56
        %p611 = scmp.lt.s32.totalorder %s38, 1
        %s612 = scalar_select %p611, %s38, 1
        %s613 = smul.addr %s612, 8
        %s614 = scalar_lea.vmem %s1, %s613
        %p615 = pneg %p85
        %p616 = pneg %p82
        %p617 = scmp.lt.s32.totalorder %s38, 1
        %s618 = scalar_select %p617, %s38, 1
        %s619 = smul.addr %s618, 8
        %s620 = scalar_lea.vmem %s2, %s619
        %p621 = pneg %p111
        %p622 = pneg %p108
        %p623 = scmp.lt.s32.totalorder %s38, 1
        %s624 = scalar_select %p623, %s38, 1
        %s625 = smul.addr %s624, 8
        %s626 = scalar_lea.vmem %s3, %s625
        %p627 = pneg %p137
        %p628 = pneg %p134
        %p629 = pneg %p158
        %p630 = pneg %p155
        %p631 = pneg %p179
        %p632 = pneg %p176
        %p633 = pneg %p200
        %p634 = pneg %p197
        %p635 = pneg %p221
        %p636 = pneg %p218
        %p637 = pneg %p242
        %p638 = pneg %p239
        %p639 = pneg %p263
        %p640 = pneg %p260
        %p641 = pneg %p284
        %p642 = pneg %p281
        %p643 = pneg %p305
        %p644 = pneg %p302
        %p645 = pneg %p326
        %p646 = pneg %p323
        %p647 = pneg %p347
        %p648 = pneg %p344
        %p649 = pneg %p368
        %p650 = pneg %p365
        %p651 = pneg %p389
        %p652 = pneg %p386
        %p653 = pneg %p410
        %p654 = pneg %p407
        %p655 = pneg %p431
        %p656 = pneg %p428
        %p657 = pneg %p457
        %p658 = pneg %p454
        %s659 = sand.u32 %s444, 1
        %s660 = scalar_lea.sflag [#allocation3], %s659
        %s661 = sand.u32 %s444, 1
        %s662 = smul.addr %s661, 8
        %s663 = scalar_lea.vmem [#allocation2], %s662
        %p664 = pneg %p483
        %p665 = pneg %p480
        %s666 = sand.u32 %s38, 1
        %s667 = scalar_lea.sflag [#allocation5], %s666
        %s668 = sand.u32 %s470, 1
        %s669 = smul.addr %s668, 32
        %s670 = scalar_lea.vmem [#allocation4], %s669
        %p671 = pneg %p509
        %p672 = pneg %p506
        %s673 = sand.u32 %s38, 1
        %s674 = scalar_lea.sflag [#allocation5], %s673
        %s675 = sand.u32 %s496, 1
        %s676 = smul.addr %s675, 32
        %s677 = scalar_lea.vmem [#allocation6], %s676
        %p678 = scmp.lt.s32.totalorder %s38, 1
        %s679 = scalar_select %p678, %s38, 1
        %s680 = smul.addr %s679, 8
        %s681 = scalar_lea.vmem %s0, %s680
        %p682 = scmp.lt.s32.totalorder %s38, 1
        %s683 = scalar_select %p682, %s38, 1
        %s684 = smul.addr %s683, 8
        %s685 = scalar_lea.vmem %s1, %s684
        %p686 = scmp.lt.s32.totalorder %s38, 1
        %s687 = scalar_select %p686, %s38, 1
        %s688 = smul.addr %s687, 8
        %s689 = scalar_lea.vmem %s2, %s688
        %p690 = scmp.lt.s32.totalorder %s38, 1
        %s691 = scalar_select %p690, %s38, 1
        %s692 = smul.addr %s691, 8
        %s693 = scalar_lea.vmem %s3, %s692
        %v695 = vld [vmem:[%s681] sm:$0xff]
        %v696 = vld [vmem:[%s685] sm:$0xff]
        %v697 = vld [vmem:[%s689] sm:$0xff]
        %v698 = vld [vmem:[%s693] sm:$0xff]
        %v699 = vld [vmem:[%s12] sm:$0x7]
        %v700 = vld [vmem:[%s13] sm:$0x7]
        %v701 = vld [vmem:[%s4] sm:$0xf]
        %v702 = vld [vmem:[%s4 + $0x4] sm:$0xf]
        %v703 = vld [vmem:[%s4 + $0x8] sm:$0xf]
        %v704 = vld [vmem:[%s4 + $0xc] sm:$0xf]
        %v705 = vld [vmem:[%s4 + $0x10] sm:$0xf]
        %v706 = vld [vmem:[%s4 + $0x14] sm:$0xf]
        %v707 = vld [vmem:[%s4 + $0x18] sm:$0xf]
        %v708 = vld [vmem:[%s4 + $0x1c] sm:$0xf]
        %v709 = vld [vmem:[%s4 + $0x20] sm:$0xf]
        %v710 = vld [vmem:[%s4 + $0x24] sm:$0xf]
        %v711 = vld [vmem:[%s4 + $0x28] sm:$0xf]
        %v712 = vld [vmem:[%s4 + $0x2c] sm:$0xf]
        %v713 = vld [vmem:[%s4 + $0x30] sm:$0xf]
        %v714 = vld [vmem:[%s4 + $0x34] sm:$0xf]
        %v715 = vld [vmem:[%s4 + $0x38] sm:$0xf]
        %v716 = vld [vmem:[%s4 + $0x3c] sm:$0xf]
        %v717 = vld [vmem:[%s4 + $0x40] sm:$0xf]
        %v718 = vld [vmem:[%s4 + $0x44] sm:$0xf]
        %v719 = vld [vmem:[%s4 + $0x48] sm:$0xf]
        %v720 = vld [vmem:[%s4 + $0x4c] sm:$0xf]
        %v721 = vld [vmem:[%s4 + $0x50] sm:$0xf]
        %v722 = vld [vmem:[%s4 + $0x54] sm:$0xf]
        %v723 = vld [vmem:[%s4 + $0x58] sm:$0xf]
        %v724 = vld [vmem:[%s4 + $0x5c] sm:$0xf]
        %v725 = vld [vmem:[%s4 + $0x60] sm:$0xf]
        %v726 = vld [vmem:[%s4 + $0x64] sm:$0xf]
        %v727 = vld [vmem:[%s4 + $0x68] sm:$0xf]
        %v728 = vld [vmem:[%s4 + $0x6c] sm:$0xf]
        %v729 = vld [vmem:[%s4 + $0x70] sm:$0xf]
        %v730 = vld [vmem:[%s4 + $0x74] sm:$0xf]
        %v731 = vld [vmem:[%s4 + $0x78] sm:$0xf]
        %v732 = vld [vmem:[%s4 + $0x7c] sm:$0xf]
        %v733 = vld [vmem:[%s4 + $0x80] sm:$0xf]
        %v734 = vld [vmem:[%s4 + $0x84] sm:$0xf]
        %v735 = vld [vmem:[%s4 + $0x88] sm:$0xf]
        %v736 = vld [vmem:[%s4 + $0x8c] sm:$0xf]
        %v737 = vld [vmem:[%s4 + $0x90] sm:$0xf]
        %v738 = vld [vmem:[%s4 + $0x94] sm:$0xf]
        %v739 = vld [vmem:[%s4 + $0x98] sm:$0xf]
        %v740 = vld [vmem:[%s4 + $0x9c] sm:$0xf]
        %v741 = vld [vmem:[%s4 + $0xa0] sm:$0xf]
        %v742 = vld [vmem:[%s4 + $0xa4] sm:$0xf]
        %v743 = vld [vmem:[%s4 + $0xa8] sm:$0xf]
        %v744 = vld [vmem:[%s4 + $0xac] sm:$0xf]
        %v745 = vld [vmem:[%s4 + $0xb0] sm:$0xf]
        %v746 = vld [vmem:[%s4 + $0xb4] sm:$0xf]
        %v747 = vld [vmem:[%s4 + $0xb8] sm:$0xf]
        %v748 = vld [vmem:[%s4 + $0xbc] sm:$0xf]
        %v749 = vld [vmem:[%s5] sm:$0x1]
        %v750 = vld [vmem:[%s5 + $0x1] sm:$0x1]
        %v751 = vld [vmem:[%s5 + $0x2] sm:$0x1]
        %v752 = vld [vmem:[%s5 + $0x3] sm:$0x1]
        %v753 = vld [vmem:[%s5 + $0x4] sm:$0x1]
        %v754 = vld [vmem:[%s5 + $0x5] sm:$0x1]
        %v755 = vld [vmem:[%s5 + $0x6] sm:$0x1]
        %v756 = vld [vmem:[%s5 + $0x7] sm:$0x1]
        %v757 = vld [vmem:[%s5 + $0x8] sm:$0x1]
        %v758 = vld [vmem:[%s5 + $0x9] sm:$0x1]
        %v759 = vld [vmem:[%s5 + $0xa] sm:$0x1]
        %v760 = vld [vmem:[%s5 + $0xb] sm:$0x1]
        %v761 = vpack.c.bf16 %v695, %v695
        %v766 = vperm.slane %v749, 0
        %v767 = vperm.slane %v750, 0
        %v768 = vperm.slane %v751, 0
        %v769 = vperm.slane %v752, 0
        %v778 = vunpack.c.l.b16 %v701
        %v779 = vunpack.c.l.b16 %v702
        %v780 = vunpack.c.l.b16 %v703
        %v781 = vunpack.c.l.b16 %v704
        %v782 = vpack.c.b16 %v779, %v778
        %v783 = vpack.c.b16 %v781, %v780
        %vm786 = vcmask 261120
        %v788 = vsel %vm786, %v761, 0
        %790 = vmatpush.bf16.msra.mxu0 0
        %791 = vmatpush.bf16.msra.mxu0 0
        %792 = vmatpush.bf16.msra.mxu0 0
        %793 = vmatpush.bf16.msra.mxu0 0
        %794 = vmatpush.bf16.msra.mxu0 0
        %795 = vmatpush.bf16.msra.mxu0 0
        %796 = vmatpush.bf16.msra.mxu0 %v783
        %797 = vmatpush.bf16.msra.mxu0 %v782
        %798 = vmatmul.bf16.gmra.mxu0 %v788
        %v799 = vpop.f32.mrf.mxu0
        %v800 = vadd.f32 %v766, %v799
        %v801 = vpop.f32.mrf.mxu0
        %802 = vdwg.mxu0
        %v807 = vunpack.c.l.b16 %v705
        %v808 = vunpack.c.l.b16 %v706
        %v809 = vunpack.c.l.b16 %v707
        %v810 = vunpack.c.l.b16 %v708
        %v811 = vpack.c.b16 %v808, %v807
        %v812 = vpack.c.b16 %v810, %v809
        %815 = vmatpush.bf16.msra.mxu0 0
        %816 = vmatpush.bf16.msra.mxu0 0
        %817 = vmatpush.bf16.msra.mxu0 0
        %818 = vmatpush.bf16.msra.mxu0 0
        %819 = vmatpush.bf16.msra.mxu0 0
        %820 = vmatpush.bf16.msra.mxu0 0
        %821 = vmatpush.bf16.msra.mxu0 %v812
        %822 = vmatpush.bf16.msra.mxu0 %v811
        %823 = vmatmul.bf16.gmra.mxu0 %v788
        %v824 = vpop.f32.mrf.mxu0
        %v825 = vadd.f32 %v767, %v824
        %v826 = vpop.f32.mrf.mxu0
        %827 = vdwg.mxu0
        %v832 = vunpack.c.l.b16 %v709
        %v833 = vunpack.c.l.b16 %v710
        %v834 = vunpack.c.l.b16 %v711
        %v835 = vunpack.c.l.b16 %v712
        %v836 = vpack.c.b16 %v833, %v832
        %v837 = vpack.c.b16 %v835, %v834
        %840 = vmatpush.bf16.msra.mxu0 0
        %841 = vmatpush.bf16.msra.mxu0 0
        %842 = vmatpush.bf16.msra.mxu0 0
        %843 = vmatpush.bf16.msra.mxu0 0
        %844 = vmatpush.bf16.msra.mxu0 0
        %845 = vmatpush.bf16.msra.mxu0 0
        %846 = vmatpush.bf16.msra.mxu0 %v837
        %847 = vmatpush.bf16.msra.mxu0 %v836
        %848 = vmatmul.bf16.gmra.mxu0 %v788
        %v849 = vpop.f32.mrf.mxu0
        %v850 = vadd.f32 %v768, %v849
        %v851 = vpop.f32.mrf.mxu0
        %852 = vdwg.mxu0
        %v857 = vunpack.c.l.b16 %v713
        %v858 = vunpack.c.l.b16 %v714
        %v859 = vunpack.c.l.b16 %v715
        %v860 = vunpack.c.l.b16 %v716
        %v861 = vpack.c.b16 %v858, %v857
        %v862 = vpack.c.b16 %v860, %v859
        %865 = vmatpush.bf16.msra.mxu0 0
        %866 = vmatpush.bf16.msra.mxu0 0
        %867 = vmatpush.bf16.msra.mxu0 0
        %868 = vmatpush.bf16.msra.mxu0 0
        %869 = vmatpush.bf16.msra.mxu0 0
        %870 = vmatpush.bf16.msra.mxu0 0
        %871 = vmatpush.bf16.msra.mxu0 %v862
        %872 = vmatpush.bf16.msra.mxu0 %v861
        %873 = vmatmul.bf16.gmra.mxu0 %v788
        %v874 = vpop.f32.mrf.mxu0
        %v875 = vadd.f32 %v769, %v874
        %v876 = vpop.f32.mrf.mxu0
        %877 = vdwg.mxu0
        %v882 = vperm.slane %v753, 0
        %v883 = vperm.slane %v754, 0
        %v884 = vperm.slane %v755, 0
        %v885 = vperm.slane %v756, 0
        %v894 = vunpack.c.l.b16 %v717
        %v895 = vunpack.c.l.b16 %v718
        %v896 = vunpack.c.l.b16 %v719
        %v897 = vunpack.c.l.b16 %v720
        %v898 = vpack.c.b16 %v895, %v894
        %v899 = vpack.c.b16 %v897, %v896
        %902 = vmatpush.bf16.msra.mxu0 0
        %903 = vmatpush.bf16.msra.mxu0 0
        %904 = vmatpush.bf16.msra.mxu0 0
        %905 = vmatpush.bf16.msra.mxu0 0
        %906 = vmatpush.bf16.msra.mxu0 0
        %907 = vmatpush.bf16.msra.mxu0 0
        %908 = vmatpush.bf16.msra.mxu0 %v899
        %909 = vmatpush.bf16.msra.mxu0 %v898
        %910 = vmatmul.bf16.gmra.mxu0 %v788
        %v911 = vpop.f32.mrf.mxu0
        %v912 = vadd.f32 %v882, %v911
        %v913 = vpop.f32.mrf.mxu0
        %914 = vdwg.mxu0
        %v919 = vunpack.c.l.b16 %v721
        %v920 = vunpack.c.l.b16 %v722
        %v921 = vunpack.c.l.b16 %v723
        %v922 = vunpack.c.l.b16 %v724
        %v923 = vpack.c.b16 %v920, %v919
        %v924 = vpack.c.b16 %v922, %v921
        %927 = vmatpush.bf16.msra.mxu0 0
        %928 = vmatpush.bf16.msra.mxu0 0
        %929 = vmatpush.bf16.msra.mxu0 0
        %930 = vmatpush.bf16.msra.mxu0 0
        %931 = vmatpush.bf16.msra.mxu0 0
        %932 = vmatpush.bf16.msra.mxu0 0
        %933 = vmatpush.bf16.msra.mxu0 %v924
        %934 = vmatpush.bf16.msra.mxu0 %v923
        %935 = vmatmul.bf16.gmra.mxu0 %v788
        %v936 = vpop.f32.mrf.mxu0
        %v937 = vadd.f32 %v883, %v936
        %v938 = vpop.f32.mrf.mxu0
        %939 = vdwg.mxu0
        %v944 = vunpack.c.l.b16 %v725
        %v945 = vunpack.c.l.b16 %v726
        %v946 = vunpack.c.l.b16 %v727
        %v947 = vunpack.c.l.b16 %v728
        %v948 = vpack.c.b16 %v945, %v944
        %v949 = vpack.c.b16 %v947, %v946
        %952 = vmatpush.bf16.msra.mxu0 0
        %953 = vmatpush.bf16.msra.mxu0 0
        %954 = vmatpush.bf16.msra.mxu0 0
        %955 = vmatpush.bf16.msra.mxu0 0
        %956 = vmatpush.bf16.msra.mxu0 0
        %957 = vmatpush.bf16.msra.mxu0 0
        %958 = vmatpush.bf16.msra.mxu0 %v949
        %959 = vmatpush.bf16.msra.mxu0 %v948
        %960 = vmatmul.bf16.gmra.mxu0 %v788
        %v961 = vpop.f32.mrf.mxu0
        %v962 = vadd.f32 %v884, %v961
        %v963 = vpop.f32.mrf.mxu0
        %964 = vdwg.mxu0
        %v969 = vunpack.c.l.b16 %v729
        %v970 = vunpack.c.l.b16 %v730
        %v971 = vunpack.c.l.b16 %v731
        %v972 = vunpack.c.l.b16 %v732
        %v973 = vpack.c.b16 %v970, %v969
        %v974 = vpack.c.b16 %v972, %v971
        %977 = vmatpush.bf16.msra.mxu0 0
        %978 = vmatpush.bf16.msra.mxu0 0
        %979 = vmatpush.bf16.msra.mxu0 0
        %980 = vmatpush.bf16.msra.mxu0 0
        %981 = vmatpush.bf16.msra.mxu0 0
        %982 = vmatpush.bf16.msra.mxu0 0
        %983 = vmatpush.bf16.msra.mxu0 %v974
        %984 = vmatpush.bf16.msra.mxu0 %v973
        %985 = vmatmul.bf16.gmra.mxu0 %v788
        %v986 = vpop.f32.mrf.mxu0
        %v987 = vadd.f32 %v885, %v986
        %v988 = vpop.f32.mrf.mxu0
        %989 = vdwg.mxu0
        %v994 = vperm.slane %v757, 0
        %v995 = vperm.slane %v758, 0
        %v996 = vperm.slane %v759, 0
        %v997 = vperm.slane %v760, 0
        %v1006 = vunpack.c.l.b16 %v733
        %v1007 = vunpack.c.l.b16 %v734
        %v1008 = vunpack.c.l.b16 %v735
        %v1009 = vunpack.c.l.b16 %v736
        %v1010 = vpack.c.b16 %v1007, %v1006
        %v1011 = vpack.c.b16 %v1009, %v1008
        %1014 = vmatpush.bf16.msra.mxu0 0
        %1015 = vmatpush.bf16.msra.mxu0 0
        %1016 = vmatpush.bf16.msra.mxu0 0
        %1017 = vmatpush.bf16.msra.mxu0 0
        %1018 = vmatpush.bf16.msra.mxu0 0
        %1019 = vmatpush.bf16.msra.mxu0 0
        %1020 = vmatpush.bf16.msra.mxu0 %v1011
        %1021 = vmatpush.bf16.msra.mxu0 %v1010
        %1022 = vmatmul.bf16.gmra.mxu0 %v788
        %v1023 = vpop.f32.mrf.mxu0
        %v1024 = vadd.f32 %v994, %v1023
        %v1025 = vpop.f32.mrf.mxu0
        %1026 = vdwg.mxu0
        %v1031 = vunpack.c.l.b16 %v737
        %v1032 = vunpack.c.l.b16 %v738
        %v1033 = vunpack.c.l.b16 %v739
        %v1034 = vunpack.c.l.b16 %v740
        %v1035 = vpack.c.b16 %v1032, %v1031
        %v1036 = vpack.c.b16 %v1034, %v1033
        %1039 = vmatpush.bf16.msra.mxu0 0
        %1040 = vmatpush.bf16.msra.mxu0 0
        %1041 = vmatpush.bf16.msra.mxu0 0
        %1042 = vmatpush.bf16.msra.mxu0 0
        %1043 = vmatpush.bf16.msra.mxu0 0
        %1044 = vmatpush.bf16.msra.mxu0 0
        %1045 = vmatpush.bf16.msra.mxu0 %v1036
        %1046 = vmatpush.bf16.msra.mxu0 %v1035
        %1047 = vmatmul.bf16.gmra.mxu0 %v788
        %v1048 = vpop.f32.mrf.mxu0
        %v1049 = vadd.f32 %v995, %v1048
        %v1050 = vpop.f32.mrf.mxu0
        %1051 = vdwg.mxu0
        %v1056 = vunpack.c.l.b16 %v741
        %v1057 = vunpack.c.l.b16 %v742
        %v1058 = vunpack.c.l.b16 %v743
        %v1059 = vunpack.c.l.b16 %v744
        %v1060 = vpack.c.b16 %v1057, %v1056
        %v1061 = vpack.c.b16 %v1059, %v1058
        %1064 = vmatpush.bf16.msra.mxu0 0
        %1065 = vmatpush.bf16.msra.mxu0 0
        %1066 = vmatpush.bf16.msra.mxu0 0
        %1067 = vmatpush.bf16.msra.mxu0 0
        %1068 = vmatpush.bf16.msra.mxu0 0
        %1069 = vmatpush.bf16.msra.mxu0 0
        %1070 = vmatpush.bf16.msra.mxu0 %v1061
        %1071 = vmatpush.bf16.msra.mxu0 %v1060
        %1072 = vmatmul.bf16.gmra.mxu0 %v788
        %v1073 = vpop.f32.mrf.mxu0
        %v1074 = vadd.f32 %v996, %v1073
        %v1075 = vpop.f32.mrf.mxu0
        %1076 = vdwg.mxu0
        %v1081 = vunpack.c.l.b16 %v745
        %v1082 = vunpack.c.l.b16 %v746
        %v1083 = vunpack.c.l.b16 %v747
        %v1084 = vunpack.c.l.b16 %v748
        %v1085 = vpack.c.b16 %v1082, %v1081
        %v1086 = vpack.c.b16 %v1084, %v1083
        %1089 = vmatpush.bf16.msra.mxu0 0
        %1090 = vmatpush.bf16.msra.mxu0 0
        %1091 = vmatpush.bf16.msra.mxu0 0
        %1092 = vmatpush.bf16.msra.mxu0 0
        %1093 = vmatpush.bf16.msra.mxu0 0
        %1094 = vmatpush.bf16.msra.mxu0 0
        %1095 = vmatpush.bf16.msra.mxu0 %v1086
        %1096 = vmatpush.bf16.msra.mxu0 %v1085
        %1097 = vmatmul.bf16.gmra.mxu0 %v788
        %v1098 = vpop.f32.mrf.mxu0
        %v1099 = vadd.f32 %v997, %v1098
        %v1100 = vpop.f32.mrf.mxu0
        %1101 = vdwg.mxu0
        %v1102 = vmul.f32 %v800, 0.35355338
        %v1103 = vmul.f32 %v825, 0.35355338
        %v1104 = vmul.f32 %v850, 0.35355338
        %v1105 = vmul.f32 %v875, 0.35355338
        %v1106 = vpack.c.bf16 %v1102, %v1102
        %v1107 = vpack.c.bf16 %v1103, %v1103
        %v1108 = vpack.c.bf16 %v1104, %v1104
        %v1109 = vpack.c.bf16 %v1105, %v1105
        %v1110 = vpack.c.bf16 %v912, %v912
        %v1111 = vpack.c.bf16 %v937, %v937
        %v1112 = vpack.c.bf16 %v962, %v962
        %v1113 = vpack.c.bf16 %v987, %v987
        %vm1114 = vcmask 64512
        %v1116 = vsel %vm1114, %v1106, 0
        %v1119 = vsel %vm1114, %v1110, 0
        %1121 = vmatpush.bf16.xpose.msra.mxu0 0
        %1122 = vmatpush.bf16.xpose.msra.mxu0 0
        %1123 = vmatpush.bf16.xpose.msra.mxu0 0
        %1124 = vmatpush.bf16.xpose.msra.mxu0 0
        %1125 = vmatpush.bf16.xpose.msra.mxu0 0
        %1126 = vmatpush.bf16.xpose.msra.mxu0 0
        %1127 = vmatpush.bf16.xpose.msra.mxu0 0
        %1128 = vmatpush.bf16.xpose.msra.mxu0 %v1119
        %1129 = vmatmul.bf16.gmra.mxu0 %v1116
        %v1130 = vpop.f32.mrf.mxu0
        %v1131 = vadd.f32 %v697, %v1130
        %v1132 = vpop.f32.mrf.mxu0
        %1133 = vdwg.mxu0
        %v1135 = vsel %vm1114, %v1107, 0
        %v1138 = vsel %vm1114, %v1111, 0
        %1140 = vmatpush.bf16.xpose.msra.mxu0 0
        %1141 = vmatpush.bf16.xpose.msra.mxu0 0
        %1142 = vmatpush.bf16.xpose.msra.mxu0 0
        %1143 = vmatpush.bf16.xpose.msra.mxu0 0
        %1144 = vmatpush.bf16.xpose.msra.mxu0 0
        %1145 = vmatpush.bf16.xpose.msra.mxu0 0
        %1146 = vmatpush.bf16.xpose.msra.mxu0 0
        %1147 = vmatpush.bf16.xpose.msra.mxu0 %v1138
        %1148 = vmatmul.bf16.gmra.mxu0 %v1135
        %v1149 = vpop.f32.mrf.mxu0
        %v1150 = vadd.f32 %v697, %v1149
        %v1151 = vpop.f32.mrf.mxu0
        %1152 = vdwg.mxu0
        %v1154 = vsel %vm1114, %v1108, 0
        %v1157 = vsel %vm1114, %v1112, 0
        %1159 = vmatpush.bf16.xpose.msra.mxu0 0
        %1160 = vmatpush.bf16.xpose.msra.mxu0 0
        %1161 = vmatpush.bf16.xpose.msra.mxu0 0
        %1162 = vmatpush.bf16.xpose.msra.mxu0 0
        %1163 = vmatpush.bf16.xpose.msra.mxu0 0
        %1164 = vmatpush.bf16.xpose.msra.mxu0 0
        %1165 = vmatpush.bf16.xpose.msra.mxu0 0
        %1166 = vmatpush.bf16.xpose.msra.mxu0 %v1157
        %1167 = vmatmul.bf16.gmra.mxu0 %v1154
        %v1168 = vpop.f32.mrf.mxu0
        %v1169 = vadd.f32 %v697, %v1168
        %v1170 = vpop.f32.mrf.mxu0
        %1171 = vdwg.mxu0
        %v1173 = vsel %vm1114, %v1109, 0
        %v1176 = vsel %vm1114, %v1113, 0
        %1178 = vmatpush.bf16.xpose.msra.mxu0 0
        %1179 = vmatpush.bf16.xpose.msra.mxu0 0
        %1180 = vmatpush.bf16.xpose.msra.mxu0 0
        %1181 = vmatpush.bf16.xpose.msra.mxu0 0
        %1182 = vmatpush.bf16.xpose.msra.mxu0 0
        %1183 = vmatpush.bf16.xpose.msra.mxu0 0
        %1184 = vmatpush.bf16.xpose.msra.mxu0 0
        %1185 = vmatpush.bf16.xpose.msra.mxu0 %v1176
        %1186 = vmatmul.bf16.gmra.mxu0 %v1173
        %v1187 = vpop.f32.mrf.mxu0
        %v1188 = vadd.f32 %v697, %v1187
        %v1189 = vpop.f32.mrf.mxu0
        %1190 = vdwg.mxu0
        %v1191 = vsel %vm1114, %v1131, -inf
        %1192 = vmax.xlane.f32.xlu0 %v1191
        %v1193 = vpop.xlane.xlu0 %1192
        %v1194 = vsel %vm1114, %v1150, -inf
        %1195 = vmax.xlane.f32.xlu0 %v1194
        %v1196 = vpop.xlane.xlu0 %1195
        %v1197 = vsel %vm1114, %v1169, -inf
        %1198 = vmax.xlane.f32.xlu0 %v1197
        %v1199 = vpop.xlane.xlu0 %1198
        %v1200 = vsel %vm1114, %v1188, -inf
        %1201 = vmax.xlane.f32.xlu0 %v1200
        %v1202 = vpop.xlane.xlu0 %1201
        %v1203 = vsub.f32 %v1131, %v1193
        %v1204 = vsub.f32 %v1150, %v1196
        %v1205 = vsub.f32 %v1169, %v1199
        %v1206 = vsub.f32 %v1188, %v1202
        %v1207 = vmul.f32 %v1203, 1.442695
        %v1208 = vpow.pop %v1207
        %v1209 = vmul.f32 %v1204, 1.442695
        %v1210 = vpow.pop %v1209
        %v1211 = vmul.f32 %v1205, 1.442695
        %v1212 = vpow.pop %v1211
        %v1213 = vmul.f32 %v1206, 1.442695
        %v1214 = vpow.pop %v1213
        %v1215 = vsel %vm1114, %v1208, 0.0
        %1216 = vadd.xlane.f32.xlu0 %v1215
        %v1217 = vpop.xlane.xlu0 %1216
        %v1218 = vsel %vm1114, %v1210, 0.0
        %1219 = vadd.xlane.f32.xlu0 %v1218
        %v1220 = vpop.xlane.xlu0 %1219
        %v1221 = vsel %vm1114, %v1212, 0.0
        %1222 = vadd.xlane.f32.xlu0 %v1221
        %v1223 = vpop.xlane.xlu0 %1222
        %v1224 = vsel %vm1114, %v1214, 0.0
        %1225 = vadd.xlane.f32.xlu0 %v1224
        %v1226 = vpop.xlane.xlu0 %1225
        %v1227 = vrcp.pop %v1217
        %v1228 = vrcp.pop %v1220
        %v1229 = vrcp.pop %v1223
        %v1230 = vrcp.pop %v1226
        %v1231 = vmul.f32 %v1208, %v1227
        %v1232 = vmul.f32 %v1210, %v1228
        %v1233 = vmul.f32 %v1212, %v1229
        %v1234 = vmul.f32 %v1214, %v1230
        %1235 = vst.msk [vmem:[%s670] sm:$0xff] %vm1114, %v1231
        %1236 = vst.msk [vmem:[%s670 + $0x8] sm:$0xff] %vm1114, %v1232
        %1237 = vst.msk [vmem:[%s670 + $0x10] sm:$0xff] %vm1114, %v1233
        %1238 = vst.msk [vmem:[%s670 + $0x18] sm:$0xff] %vm1114, %v1234
        %v1239 = vpack.c.bf16 %v1231, %v1231
        %v1240 = vpack.c.bf16 %v1232, %v1232
        %v1241 = vpack.c.bf16 %v1233, %v1233
        %v1242 = vpack.c.bf16 %v1234, %v1234
        %v1243 = vpack.c.bf16 %v1024, %v1024
        %v1244 = vpack.c.bf16 %v1049, %v1049
        %v1245 = vpack.c.bf16 %v1074, %v1074
        %v1246 = vpack.c.bf16 %v1099, %v1099
        %v1248 = vsel %vm1114, %v1239, 0
        %vm1250 = vcmask 1043456
        %v1252 = vsel %vm1250, %v1243, 0
        %1254 = vmatpush.bf16.msra.mxu0 0
        %1255 = vmatpush.bf16.msra.mxu0 0
        %1256 = vmatpush.bf16.msra.mxu0 0
        %1257 = vmatpush.bf16.msra.mxu0 0
        %1258 = vmatpush.bf16.msra.mxu0 0
        %1259 = vmatpush.bf16.msra.mxu0 0
        %1260 = vmatpush.bf16.msra.mxu0 0
        %1261 = vmatpush.bf16.msra.mxu0 %v1252
        %1262 = vmatmul.bf16.gmra.mxu0 %v1248
        %v1263 = vpop.f32.mrf.mxu0
        %v1264 = vadd.f32 0.0, %v1263
        %v1265 = vpop.f32.mrf.mxu0
        %1266 = vdwg.mxu0
        %v1268 = vsel %vm1114, %v1240, 0
        %v1271 = vsel %vm1250, %v1244, 0
        %1273 = vmatpush.bf16.msra.mxu0 0
        %1274 = vmatpush.bf16.msra.mxu0 0
        %1275 = vmatpush.bf16.msra.mxu0 0
        %1276 = vmatpush.bf16.msra.mxu0 0
        %1277 = vmatpush.bf16.msra.mxu0 0
        %1278 = vmatpush.bf16.msra.mxu0 0
        %1279 = vmatpush.bf16.msra.mxu0 0
        %1280 = vmatpush.bf16.msra.mxu0 %v1271
        %1281 = vmatmul.bf16.gmra.mxu0 %v1268
        %v1282 = vpop.f32.mrf.mxu0
        %v1283 = vadd.f32 0.0, %v1282
        %v1284 = vpop.f32.mrf.mxu0
        %1285 = vdwg.mxu0
        %v1287 = vsel %vm1114, %v1241, 0
        %v1290 = vsel %vm1250, %v1245, 0
        %1292 = vmatpush.bf16.msra.mxu0 0
        %1293 = vmatpush.bf16.msra.mxu0 0
        %1294 = vmatpush.bf16.msra.mxu0 0
        %1295 = vmatpush.bf16.msra.mxu0 0
        %1296 = vmatpush.bf16.msra.mxu0 0
        %1297 = vmatpush.bf16.msra.mxu0 0
        %1298 = vmatpush.bf16.msra.mxu0 0
        %1299 = vmatpush.bf16.msra.mxu0 %v1290
        %1300 = vmatmul.bf16.gmra.mxu0 %v1287
        %v1301 = vpop.f32.mrf.mxu0
        %v1302 = vadd.f32 0.0, %v1301
        %v1303 = vpop.f32.mrf.mxu0
        %1304 = vdwg.mxu0
        %v1306 = vsel %vm1114, %v1242, 0
        %v1309 = vsel %vm1250, %v1246, 0
        %1311 = vmatpush.bf16.msra.mxu0 0
        %1312 = vmatpush.bf16.msra.mxu0 0
        %1313 = vmatpush.bf16.msra.mxu0 0
        %1314 = vmatpush.bf16.msra.mxu0 0
        %1315 = vmatpush.bf16.msra.mxu0 0
        %1316 = vmatpush.bf16.msra.mxu0 0
        %1317 = vmatpush.bf16.msra.mxu0 0
        %1318 = vmatpush.bf16.msra.mxu0 %v1309
        %1319 = vmatmul.bf16.gmra.mxu0 %v1306
        %v1320 = vpop.f32.mrf.mxu0
        %v1321 = vadd.f32 0.0, %v1320
        %v1322 = vpop.f32.mrf.mxu0
        %1323 = vdwg.mxu0
        %v1324 = vpack.c.bf16 %v1264, %v1264
        %v1325 = vpack.c.bf16 %v1283, %v1283
        %v1326 = vpack.c.bf16 %v1302, %v1302
        %v1327 = vpack.c.bf16 %v1321, %v1321
        %v1328 = vld [vmem:[%s6] sm:$0xf]
        %v1329 = vld [vmem:[%s6 + $0x4] sm:$0xf]
        %v1330 = vld [vmem:[%s6 + $0x8] sm:$0xf]
        %v1331 = vld [vmem:[%s6 + $0xc] sm:$0xf]
        %v1333 = vsel %vm1114, %v1324, 0
        %v1336 = vsel %vm1250, %v1328, 0
        %1338 = vmatpush.bf16.msra.mxu0 0
        %1339 = vmatpush.bf16.msra.mxu0 0
        %1340 = vmatpush.bf16.msra.mxu0 0
        %1341 = vmatpush.bf16.msra.mxu0 0
        %1342 = vmatpush.bf16.msra.mxu0 0
        %1343 = vmatpush.bf16.msra.mxu0 0
        %1344 = vmatpush.bf16.msra.mxu0 0
        %1345 = vmatpush.bf16.msra.mxu0 %v1336
        %1346 = vmatmul.bf16.gmra.mxu0 %v1333
        %v1347 = vpop.f32.mrf.mxu0
        %v1348 = vadd.f32 0.0, %v1347
        %v1349 = vpop.f32.mrf.mxu0
        %1350 = vdwg.mxu0
        %v1352 = vsel %vm1114, %v1325, 0
        %v1355 = vsel %vm1250, %v1329, 0
        %1357 = vmatpush.bf16.msra.mxu0 0
        %1358 = vmatpush.bf16.msra.mxu0 0
        %1359 = vmatpush.bf16.msra.mxu0 0
        %1360 = vmatpush.bf16.msra.mxu0 0
        %1361 = vmatpush.bf16.msra.mxu0 0
        %1362 = vmatpush.bf16.msra.mxu0 0
        %1363 = vmatpush.bf16.msra.mxu0 0
        %1364 = vmatpush.bf16.msra.mxu0 %v1355
        %1365 = vmatmul.bf16.gmra.mxu0 %v1352
        %v1366 = vpop.f32.mrf.mxu0
        %v1367 = vadd.f32 0.0, %v1366
        %v1368 = vpop.f32.mrf.mxu0
        %1369 = vdwg.mxu0
        %v1371 = vsel %vm1114, %v1326, 0
        %v1374 = vsel %vm1250, %v1330, 0
        %1376 = vmatpush.bf16.msra.mxu0 0
        %1377 = vmatpush.bf16.msra.mxu0 0
        %1378 = vmatpush.bf16.msra.mxu0 0
        %1379 = vmatpush.bf16.msra.mxu0 0
        %1380 = vmatpush.bf16.msra.mxu0 0
        %1381 = vmatpush.bf16.msra.mxu0 0
        %1382 = vmatpush.bf16.msra.mxu0 0
        %1383 = vmatpush.bf16.msra.mxu0 %v1374
        %1384 = vmatmul.bf16.gmra.mxu0 %v1371
        %v1385 = vpop.f32.mrf.mxu0
        %v1386 = vadd.f32 0.0, %v1385
        %v1387 = vpop.f32.mrf.mxu0
        %1388 = vdwg.mxu0
        %v1390 = vsel %vm1114, %v1327, 0
        %v1393 = vsel %vm1250, %v1331, 0
        %1395 = vmatpush.bf16.msra.mxu0 0
        %1396 = vmatpush.bf16.msra.mxu0 0
        %1397 = vmatpush.bf16.msra.mxu0 0
        %1398 = vmatpush.bf16.msra.mxu0 0
        %1399 = vmatpush.bf16.msra.mxu0 0
        %1400 = vmatpush.bf16.msra.mxu0 0
        %1401 = vmatpush.bf16.msra.mxu0 0
        %1402 = vmatpush.bf16.msra.mxu0 %v1393
        %1403 = vmatmul.bf16.gmra.mxu0 %v1390
        %v1404 = vpop.f32.mrf.mxu0
        %v1405 = vadd.f32 0.0, %v1404
        %v1406 = vpop.f32.mrf.mxu0
        %1407 = vdwg.mxu0
        %v1408 = vsel %vm786, %v1348, 0.0
        %v1409 = vsel %vm786, %v1367, 0.0
        %v1410 = vadd.f32 %v1408, %v1409
        %v1411 = vsel %vm786, %v1386, 0.0
        %v1412 = vadd.f32 %v1410, %v1411
        %v1413 = vsel %vm786, %v1405, 0.0
        %v1414 = vadd.f32 %v1412, %v1413
        %v1415 = vld [vmem:[%s7] sm:$0x1]
        %v1417 = vperm.slane %v1415, 0
        %v1419 = vadd.f32 %v1414, %v1417
        %v1420 = vadd.f32 %v695, %v1419
        %v1421 = vsel %vm786, %v1420, 0.0
        %1422 = vadd.xlane.f32.xlu0 %v1421
        %v1423 = vpop.xlane.xlu0 %1422
        %v1424 = vrcp.pop 32.0
        %v1425 = vmul.f32 32.0, %v1424
        %v1426 = vsub.f32 1.0, %v1425
        %v1427 = vmul.f32 %v1424, %v1426
        %v1428 = vadd.f32 %v1424, %v1427
        %vm1429 = vweird.f32 %v1424
        %v1430 = vsel %vm1429, %v1424, %v1428
        %v1431 = vmul.f32 %v1423, %v1430
        %v1432 = vsub.f32 %v1420, %v1431
        %v1433 = vmul.f32 %v1432, %v1432
        %v1434 = vsel %vm786, %v1433, 0.0
        %1435 = vadd.xlane.f32.xlu0 %v1434
        %v1436 = vpop.xlane.xlu0 %1435
        %v1437 = vmul.f32 %v1436, %v1430
        %v1438 = vadd.f32 %v1437, 1e-05
        %v1439 = vrsqrt.pop %v1438
        %v1440 = vmul.f32 %v1439, %v1438
        %v1441 = vmul.f32 %v1440, %v1439
        %v1442 = vmul.f32 0.5, %v1441
        %v1443 = vsub.f32 1.5, %v1442
        %v1444 = vmul.f32 %v1439, %v1443
        %vm1445 = vweird.f32 %v1438
        %vm1446 = vweird.f32 %v1439
        %vm1447 = vmor %vm1445, %vm1446
        %v1448 = vsel %vm1447, %v1439, %v1444
        %v1449 = vmul.f32 %v1432, %v1448
        %v1450 = vperm.slane %v699, 0
        %v1451 = vmul.f32 %v1449, %v1450
        %v1452 = vperm.slane %v700, 0
        %v1453 = vadd.f32 %v1451, %v1452
        %v1454 = vld [vmem:[%s8] sm:$0xf]
        %v1455 = vld [vmem:[%s8 + $0x4] sm:$0xf]
        %v1456 = vld [vmem:[%s8 + $0x8] sm:$0xf]
        %v1457 = vld [vmem:[%s8 + $0xc] sm:$0xf]
        %v1458 = vld [vmem:[%s8 + $0x10] sm:$0xf]
        %v1459 = vld [vmem:[%s8 + $0x14] sm:$0xf]
        %v1460 = vld [vmem:[%s8 + $0x18] sm:$0xf]
        %v1461 = vld [vmem:[%s8 + $0x1c] sm:$0xf]
        %v1462 = vld [vmem:[%s8 + $0x20] sm:$0xf]
        %v1463 = vld [vmem:[%s8 + $0x24] sm:$0xf]
        %v1464 = vld [vmem:[%s8 + $0x28] sm:$0xf]
        %v1465 = vld [vmem:[%s8 + $0x2c] sm:$0xf]
        %v1466 = vld [vmem:[%s8 + $0x30] sm:$0xf]
        %v1467 = vld [vmem:[%s8 + $0x34] sm:$0xf]
        %v1468 = vld [vmem:[%s8 + $0x38] sm:$0xf]
        %v1469 = vld [vmem:[%s8 + $0x3c] sm:$0xf]
        %v1470 = vld [vmem:[%s8 + $0x40] sm:$0xf]
        %v1471 = vld [vmem:[%s8 + $0x44] sm:$0xf]
        %v1472 = vld [vmem:[%s8 + $0x48] sm:$0xf]
        %v1473 = vld [vmem:[%s8 + $0x4c] sm:$0xf]
        %v1474 = vld [vmem:[%s8 + $0x50] sm:$0xf]
        %v1475 = vld [vmem:[%s8 + $0x54] sm:$0xf]
        %v1476 = vld [vmem:[%s8 + $0x58] sm:$0xf]
        %v1477 = vld [vmem:[%s8 + $0x5c] sm:$0xf]
        %v1478 = vld [vmem:[%s8 + $0x60] sm:$0xf]
        %v1479 = vld [vmem:[%s8 + $0x64] sm:$0xf]
        %v1480 = vld [vmem:[%s8 + $0x68] sm:$0xf]
        %v1481 = vld [vmem:[%s8 + $0x6c] sm:$0xf]
        %v1482 = vld [vmem:[%s8 + $0x70] sm:$0xf]
        %v1483 = vld [vmem:[%s8 + $0x74] sm:$0xf]
        %v1484 = vld [vmem:[%s8 + $0x78] sm:$0xf]
        %v1485 = vld [vmem:[%s8 + $0x7c] sm:$0xf]
        %v1486 = vld [vmem:[%s8 + $0x80] sm:$0xf]
        %v1487 = vld [vmem:[%s8 + $0x84] sm:$0xf]
        %v1488 = vld [vmem:[%s8 + $0x88] sm:$0xf]
        %v1489 = vld [vmem:[%s8 + $0x8c] sm:$0xf]
        %v1490 = vld [vmem:[%s8 + $0x90] sm:$0xf]
        %v1491 = vld [vmem:[%s8 + $0x94] sm:$0xf]
        %v1492 = vld [vmem:[%s8 + $0x98] sm:$0xf]
        %v1493 = vld [vmem:[%s8 + $0x9c] sm:$0xf]
        %v1494 = vld [vmem:[%s8 + $0xa0] sm:$0xf]
        %v1495 = vld [vmem:[%s8 + $0xa4] sm:$0xf]
        %v1496 = vld [vmem:[%s8 + $0xa8] sm:$0xf]
        %v1497 = vld [vmem:[%s8 + $0xac] sm:$0xf]
        %v1498 = vld [vmem:[%s8 + $0xb0] sm:$0xf]
        %v1499 = vld [vmem:[%s8 + $0xb4] sm:$0xf]
        %v1500 = vld [vmem:[%s8 + $0xb8] sm:$0xf]
        %v1501 = vld [vmem:[%s8 + $0xbc] sm:$0xf]
        %v1502 = vld [vmem:[%s9] sm:$0x1]
        %v1503 = vld [vmem:[%s9 + $0x1] sm:$0x1]
        %v1504 = vld [vmem:[%s9 + $0x2] sm:$0x1]
        %v1505 = vld [vmem:[%s9 + $0x3] sm:$0x1]
        %v1506 = vld [vmem:[%s9 + $0x4] sm:$0x1]
        %v1507 = vld [vmem:[%s9 + $0x5] sm:$0x1]
        %v1508 = vld [vmem:[%s9 + $0x6] sm:$0x1]
        %v1509 = vld [vmem:[%s9 + $0x7] sm:$0x1]
        %v1510 = vld [vmem:[%s9 + $0x8] sm:$0x1]
        %v1511 = vld [vmem:[%s9 + $0x9] sm:$0x1]
        %v1512 = vld [vmem:[%s9 + $0xa] sm:$0x1]
        %v1513 = vld [vmem:[%s9 + $0xb] sm:$0x1]
        %v1514 = vpack.c.bf16 %v1453, %v1453
        %v1515 = vpack.c.bf16 %v696, %v696
        %v1520 = vperm.slane %v1502, 0
        %v1521 = vperm.slane %v1503, 0
        %v1522 = vperm.slane %v1504, 0
        %v1523 = vperm.slane %v1505, 0
        %v1532 = vunpack.c.l.b16 %v1454
        %v1533 = vunpack.c.l.b16 %v1455
        %v1534 = vunpack.c.l.b16 %v1456
        %v1535 = vunpack.c.l.b16 %v1457
        %v1536 = vpack.c.b16 %v1533, %v1532
        %v1537 = vpack.c.b16 %v1535, %v1534
        %v1541 = vsel %vm786, %v1514, 0
        %1543 = vmatpush.bf16.msra.mxu0 0
        %1544 = vmatpush.bf16.msra.mxu0 0
        %1545 = vmatpush.bf16.msra.mxu0 0
        %1546 = vmatpush.bf16.msra.mxu0 0
        %1547 = vmatpush.bf16.msra.mxu0 0
        %1548 = vmatpush.bf16.msra.mxu0 0
        %1549 = vmatpush.bf16.msra.mxu0 %v1537
        %1550 = vmatpush.bf16.msra.mxu0 %v1536
        %1551 = vmatmul.bf16.gmra.mxu0 %v1541
        %v1552 = vpop.f32.mrf.mxu0
        %v1553 = vadd.f32 %v1520, %v1552
        %v1554 = vpop.f32.mrf.mxu0
        %1555 = vdwg.mxu0
        %v1560 = vunpack.c.l.b16 %v1458
        %v1561 = vunpack.c.l.b16 %v1459
        %v1562 = vunpack.c.l.b16 %v1460
        %v1563 = vunpack.c.l.b16 %v1461
        %v1564 = vpack.c.b16 %v1561, %v1560
        %v1565 = vpack.c.b16 %v1563, %v1562
        %1568 = vmatpush.bf16.msra.mxu0 0
        %1569 = vmatpush.bf16.msra.mxu0 0
        %1570 = vmatpush.bf16.msra.mxu0 0
        %1571 = vmatpush.bf16.msra.mxu0 0
        %1572 = vmatpush.bf16.msra.mxu0 0
        %1573 = vmatpush.bf16.msra.mxu0 0
        %1574 = vmatpush.bf16.msra.mxu0 %v1565
        %1575 = vmatpush.bf16.msra.mxu0 %v1564
        %1576 = vmatmul.bf16.gmra.mxu0 %v1541
        %v1577 = vpop.f32.mrf.mxu0
        %v1578 = vadd.f32 %v1521, %v1577
        %v1579 = vpop.f32.mrf.mxu0
        %1580 = vdwg.mxu0
        %v1585 = vunpack.c.l.b16 %v1462
        %v1586 = vunpack.c.l.b16 %v1463
        %v1587 = vunpack.c.l.b16 %v1464
        %v1588 = vunpack.c.l.b16 %v1465
        %v1589 = vpack.c.b16 %v1586, %v1585
        %v1590 = vpack.c.b16 %v1588, %v1587
        %1593 = vmatpush.bf16.msra.mxu0 0
        %1594 = vmatpush.bf16.msra.mxu0 0
        %1595 = vmatpush.bf16.msra.mxu0 0
        %1596 = vmatpush.bf16.msra.mxu0 0
        %1597 = vmatpush.bf16.msra.mxu0 0
        %1598 = vmatpush.bf16.msra.mxu0 0
        %1599 = vmatpush.bf16.msra.mxu0 %v1590
        %1600 = vmatpush.bf16.msra.mxu0 %v1589
        %1601 = vmatmul.bf16.gmra.mxu0 %v1541
        %v1602 = vpop.f32.mrf.mxu0
        %v1603 = vadd.f32 %v1522, %v1602
        %v1604 = vpop.f32.mrf.mxu0
        %1605 = vdwg.mxu0
        %v1610 = vunpack.c.l.b16 %v1466
        %v1611 = vunpack.c.l.b16 %v1467
        %v1612 = vunpack.c.l.b16 %v1468
        %v1613 = vunpack.c.l.b16 %v1469
        %v1614 = vpack.c.b16 %v1611, %v1610
        %v1615 = vpack.c.b16 %v1613, %v1612
        %1618 = vmatpush.bf16.msra.mxu0 0
        %1619 = vmatpush.bf16.msra.mxu0 0
        %1620 = vmatpush.bf16.msra.mxu0 0
        %1621 = vmatpush.bf16.msra.mxu0 0
        %1622 = vmatpush.bf16.msra.mxu0 0
        %1623 = vmatpush.bf16.msra.mxu0 0
        %1624 = vmatpush.bf16.msra.mxu0 %v1615
        %1625 = vmatpush.bf16.msra.mxu0 %v1614
        %1626 = vmatmul.bf16.gmra.mxu0 %v1541
        %v1627 = vpop.f32.mrf.mxu0
        %v1628 = vadd.f32 %v1523, %v1627
        %v1629 = vpop.f32.mrf.mxu0
        %1630 = vdwg.mxu0
        %v1635 = vperm.slane %v1506, 0
        %v1636 = vperm.slane %v1507, 0
        %v1637 = vperm.slane %v1508, 0
        %v1638 = vperm.slane %v1509, 0
        %v1647 = vunpack.c.l.b16 %v1470
        %v1648 = vunpack.c.l.b16 %v1471
        %v1649 = vunpack.c.l.b16 %v1472
        %v1650 = vunpack.c.l.b16 %v1473
        %v1651 = vpack.c.b16 %v1648, %v1647
        %v1652 = vpack.c.b16 %v1650, %v1649
        %v1656 = vsel %vm786, %v1515, 0
        %1658 = vmatpush.bf16.msra.mxu0 0
        %1659 = vmatpush.bf16.msra.mxu0 0
        %1660 = vmatpush.bf16.msra.mxu0 0
        %1661 = vmatpush.bf16.msra.mxu0 0
        %1662 = vmatpush.bf16.msra.mxu0 0
        %1663 = vmatpush.bf16.msra.mxu0 0
        %1664 = vmatpush.bf16.msra.mxu0 %v1652
        %1665 = vmatpush.bf16.msra.mxu0 %v1651
        %1666 = vmatmul.bf16.gmra.mxu0 %v1656
        %v1667 = vpop.f32.mrf.mxu0
        %v1668 = vadd.f32 %v1635, %v1667
        %v1669 = vpop.f32.mrf.mxu0
        %1670 = vdwg.mxu0
        %v1675 = vunpack.c.l.b16 %v1474
        %v1676 = vunpack.c.l.b16 %v1475
        %v1677 = vunpack.c.l.b16 %v1476
        %v1678 = vunpack.c.l.b16 %v1477
        %v1679 = vpack.c.b16 %v1676, %v1675
        %v1680 = vpack.c.b16 %v1678, %v1677
        %1683 = vmatpush.bf16.msra.mxu0 0
        %1684 = vmatpush.bf16.msra.mxu0 0
        %1685 = vmatpush.bf16.msra.mxu0 0
        %1686 = vmatpush.bf16.msra.mxu0 0
        %1687 = vmatpush.bf16.msra.mxu0 0
        %1688 = vmatpush.bf16.msra.mxu0 0
        %1689 = vmatpush.bf16.msra.mxu0 %v1680
        %1690 = vmatpush.bf16.msra.mxu0 %v1679
        %1691 = vmatmul.bf16.gmra.mxu0 %v1656
        %v1692 = vpop.f32.mrf.mxu0
        %v1693 = vadd.f32 %v1636, %v1692
        %v1694 = vpop.f32.mrf.mxu0
        %1695 = vdwg.mxu0
        %v1700 = vunpack.c.l.b16 %v1478
        %v1701 = vunpack.c.l.b16 %v1479
        %v1702 = vunpack.c.l.b16 %v1480
        %v1703 = vunpack.c.l.b16 %v1481
        %v1704 = vpack.c.b16 %v1701, %v1700
        %v1705 = vpack.c.b16 %v1703, %v1702
        %1708 = vmatpush.bf16.msra.mxu0 0
        %1709 = vmatpush.bf16.msra.mxu0 0
        %1710 = vmatpush.bf16.msra.mxu0 0
        %1711 = vmatpush.bf16.msra.mxu0 0
        %1712 = vmatpush.bf16.msra.mxu0 0
        %1713 = vmatpush.bf16.msra.mxu0 0
        %1714 = vmatpush.bf16.msra.mxu0 %v1705
        %1715 = vmatpush.bf16.msra.mxu0 %v1704
        %1716 = vmatmul.bf16.gmra.mxu0 %v1656
        %v1717 = vpop.f32.mrf.mxu0
        %v1718 = vadd.f32 %v1637, %v1717
        %v1719 = vpop.f32.mrf.mxu0
        %1720 = vdwg.mxu0
        %v1725 = vunpack.c.l.b16 %v1482
        %v1726 = vunpack.c.l.b16 %v1483
        %v1727 = vunpack.c.l.b16 %v1484
        %v1728 = vunpack.c.l.b16 %v1485
        %v1729 = vpack.c.b16 %v1726, %v1725
        %v1730 = vpack.c.b16 %v1728, %v1727
        %1733 = vmatpush.bf16.msra.mxu0 0
        %1734 = vmatpush.bf16.msra.mxu0 0
        %1735 = vmatpush.bf16.msra.mxu0 0
        %1736 = vmatpush.bf16.msra.mxu0 0
        %1737 = vmatpush.bf16.msra.mxu0 0
        %1738 = vmatpush.bf16.msra.mxu0 0
        %1739 = vmatpush.bf16.msra.mxu0 %v1730
        %1740 = vmatpush.bf16.msra.mxu0 %v1729
        %1741 = vmatmul.bf16.gmra.mxu0 %v1656
        %v1742 = vpop.f32.mrf.mxu0
        %v1743 = vadd.f32 %v1638, %v1742
        %v1744 = vpop.f32.mrf.mxu0
        %1745 = vdwg.mxu0
        %v1750 = vperm.slane %v1510, 0
        %v1751 = vperm.slane %v1511, 0
        %v1752 = vperm.slane %v1512, 0
        %v1753 = vperm.slane %v1513, 0
        %v1762 = vunpack.c.l.b16 %v1486
        %v1763 = vunpack.c.l.b16 %v1487
        %v1764 = vunpack.c.l.b16 %v1488
        %v1765 = vunpack.c.l.b16 %v1489
        %v1766 = vpack.c.b16 %v1763, %v1762
        %v1767 = vpack.c.b16 %v1765, %v1764
        %1770 = vmatpush.bf16.msra.mxu0 0
        %1771 = vmatpush.bf16.msra.mxu0 0
        %1772 = vmatpush.bf16.msra.mxu0 0
        %1773 = vmatpush.bf16.msra.mxu0 0
        %1774 = vmatpush.bf16.msra.mxu0 0
        %1775 = vmatpush.bf16.msra.mxu0 0
        %1776 = vmatpush.bf16.msra.mxu0 %v1767
        %1777 = vmatpush.bf16.msra.mxu0 %v1766
        %1778 = vmatmul.bf16.gmra.mxu0 %v1656
        %v1779 = vpop.f32.mrf.mxu0
        %v1780 = vadd.f32 %v1750, %v1779
        %v1781 = vpop.f32.mrf.mxu0
        %1782 = vdwg.mxu0
        %v1787 = vunpack.c.l.b16 %v1490
        %v1788 = vunpack.c.l.b16 %v1491
        %v1789 = vunpack.c.l.b16 %v1492
        %v1790 = vunpack.c.l.b16 %v1493
        %v1791 = vpack.c.b16 %v1788, %v1787
        %v1792 = vpack.c.b16 %v1790, %v1789
        %1795 = vmatpush.bf16.msra.mxu0 0
        %1796 = vmatpush.bf16.msra.mxu0 0
        %1797 = vmatpush.bf16.msra.mxu0 0
        %1798 = vmatpush.bf16.msra.mxu0 0
        %1799 = vmatpush.bf16.msra.mxu0 0
        %1800 = vmatpush.bf16.msra.mxu0 0
        %1801 = vmatpush.bf16.msra.mxu0 %v1792
        %1802 = vmatpush.bf16.msra.mxu0 %v1791
        %1803 = vmatmul.bf16.gmra.mxu0 %v1656
        %v1804 = vpop.f32.mrf.mxu0
        %v1805 = vadd.f32 %v1751, %v1804
        %v1806 = vpop.f32.mrf.mxu0
        %1807 = vdwg.mxu0
        %v1812 = vunpack.c.l.b16 %v1494
        %v1813 = vunpack.c.l.b16 %v1495
        %v1814 = vunpack.c.l.b16 %v1496
        %v1815 = vunpack.c.l.b16 %v1497
        %v1816 = vpack.c.b16 %v1813, %v1812
        %v1817 = vpack.c.b16 %v1815, %v1814
        %1820 = vmatpush.bf16.msra.mxu0 0
        %1821 = vmatpush.bf16.msra.mxu0 0
        %1822 = vmatpush.bf16.msra.mxu0 0
        %1823 = vmatpush.bf16.msra.mxu0 0
        %1824 = vmatpush.bf16.msra.mxu0 0
        %1825 = vmatpush.bf16.msra.mxu0 0
        %1826 = vmatpush.bf16.msra.mxu0 %v1817
        %1827 = vmatpush.bf16.msra.mxu0 %v1816
        %1828 = vmatmul.bf16.gmra.mxu0 %v1656
        %v1829 = vpop.f32.mrf.mxu0
        %v1830 = vadd.f32 %v1752, %v1829
        %v1831 = vpop.f32.mrf.mxu0
        %1832 = vdwg.mxu0
        %v1837 = vunpack.c.l.b16 %v1498
        %v1838 = vunpack.c.l.b16 %v1499
        %v1839 = vunpack.c.l.b16 %v1500
        %v1840 = vunpack.c.l.b16 %v1501
        %v1841 = vpack.c.b16 %v1838, %v1837
        %v1842 = vpack.c.b16 %v1840, %v1839
        %1845 = vmatpush.bf16.msra.mxu0 0
        %1846 = vmatpush.bf16.msra.mxu0 0
        %1847 = vmatpush.bf16.msra.mxu0 0
        %1848 = vmatpush.bf16.msra.mxu0 0
        %1849 = vmatpush.bf16.msra.mxu0 0
        %1850 = vmatpush.bf16.msra.mxu0 0
        %1851 = vmatpush.bf16.msra.mxu0 %v1842
        %1852 = vmatpush.bf16.msra.mxu0 %v1841
        %1853 = vmatmul.bf16.gmra.mxu0 %v1656
        %v1854 = vpop.f32.mrf.mxu0
        %v1855 = vadd.f32 %v1753, %v1854
        %v1856 = vpop.f32.mrf.mxu0
        %1857 = vdwg.mxu0
        %v1858 = vmul.f32 %v1553, 0.35355338
        %v1859 = vmul.f32 %v1578, 0.35355338
        %v1860 = vmul.f32 %v1603, 0.35355338
        %v1861 = vmul.f32 %v1628, 0.35355338
        %v1862 = vpack.c.bf16 %v1858, %v1858
        %v1863 = vpack.c.bf16 %v1859, %v1859
        %v1864 = vpack.c.bf16 %v1860, %v1860
        %v1865 = vpack.c.bf16 %v1861, %v1861
        %v1866 = vpack.c.bf16 %v1668, %v1668
        %v1867 = vpack.c.bf16 %v1693, %v1693
        %v1868 = vpack.c.bf16 %v1718, %v1718
        %v1869 = vpack.c.bf16 %v1743, %v1743
        %v1871 = vsel %vm1114, %v1862, 0
        %v1874 = vsel %vm1114, %v1866, 0
        %1876 = vmatpush.bf16.xpose.msra.mxu0 0
        %1877 = vmatpush.bf16.xpose.msra.mxu0 0
        %1878 = vmatpush.bf16.xpose.msra.mxu0 0
        %1879 = vmatpush.bf16.xpose.msra.mxu0 0
        %1880 = vmatpush.bf16.xpose.msra.mxu0 0
        %1881 = vmatpush.bf16.xpose.msra.mxu0 0
        %1882 = vmatpush.bf16.xpose.msra.mxu0 0
        %1883 = vmatpush.bf16.xpose.msra.mxu0 %v1874
        %1884 = vmatmul.bf16.gmra.mxu0 %v1871
        %v1885 = vpop.f32.mrf.mxu0
        %v1886 = vadd.f32 %v698, %v1885
        %v1887 = vpop.f32.mrf.mxu0
        %1888 = vdwg.mxu0
        %v1890 = vsel %vm1114, %v1863, 0
        %v1893 = vsel %vm1114, %v1867, 0
        %1895 = vmatpush.bf16.xpose.msra.mxu0 0
        %1896 = vmatpush.bf16.xpose.msra.mxu0 0
        %1897 = vmatpush.bf16.xpose.msra.mxu0 0
        %1898 = vmatpush.bf16.xpose.msra.mxu0 0
        %1899 = vmatpush.bf16.xpose.msra.mxu0 0
        %1900 = vmatpush.bf16.xpose.msra.mxu0 0
        %1901 = vmatpush.bf16.xpose.msra.mxu0 0
        %1902 = vmatpush.bf16.xpose.msra.mxu0 %v1893
        %1903 = vmatmul.bf16.gmra.mxu0 %v1890
        %v1904 = vpop.f32.mrf.mxu0
        %v1905 = vadd.f32 %v698, %v1904
        %v1906 = vpop.f32.mrf.mxu0
        %1907 = vdwg.mxu0
        %v1909 = vsel %vm1114, %v1864, 0
        %v1912 = vsel %vm1114, %v1868, 0
        %1914 = vmatpush.bf16.xpose.msra.mxu0 0
        %1915 = vmatpush.bf16.xpose.msra.mxu0 0
        %1916 = vmatpush.bf16.xpose.msra.mxu0 0
        %1917 = vmatpush.bf16.xpose.msra.mxu0 0
        %1918 = vmatpush.bf16.xpose.msra.mxu0 0
        %1919 = vmatpush.bf16.xpose.msra.mxu0 0
        %1920 = vmatpush.bf16.xpose.msra.mxu0 0
        %1921 = vmatpush.bf16.xpose.msra.mxu0 %v1912
        %1922 = vmatmul.bf16.gmra.mxu0 %v1909
        %v1923 = vpop.f32.mrf.mxu0
        %v1924 = vadd.f32 %v698, %v1923
        %v1925 = vpop.f32.mrf.mxu0
        %1926 = vdwg.mxu0
        %v1928 = vsel %vm1114, %v1865, 0
        %v1931 = vsel %vm1114, %v1869, 0
        %1933 = vmatpush.bf16.xpose.msra.mxu0 0
        %1934 = vmatpush.bf16.xpose.msra.mxu0 0
        %1935 = vmatpush.bf16.xpose.msra.mxu0 0
        %1936 = vmatpush.bf16.xpose.msra.mxu0 0
        %1937 = vmatpush.bf16.xpose.msra.mxu0 0
        %1938 = vmatpush.bf16.xpose.msra.mxu0 0
        %1939 = vmatpush.bf16.xpose.msra.mxu0 0
        %1940 = vmatpush.bf16.xpose.msra.mxu0 %v1931
        %1941 = vmatmul.bf16.gmra.mxu0 %v1928
        %v1942 = vpop.f32.mrf.mxu0
        %v1943 = vadd.f32 %v698, %v1942
        %v1944 = vpop.f32.mrf.mxu0
        %1945 = vdwg.mxu0
        %v1946 = vsel %vm1114, %v1886, -inf
        %1947 = vmax.xlane.f32.xlu0 %v1946
        %v1948 = vpop.xlane.xlu0 %1947
        %v1949 = vsel %vm1114, %v1905, -inf
        %1950 = vmax.xlane.f32.xlu0 %v1949
        %v1951 = vpop.xlane.xlu0 %1950
        %v1952 = vsel %vm1114, %v1924, -inf
        %1953 = vmax.xlane.f32.xlu0 %v1952
        %v1954 = vpop.xlane.xlu0 %1953
        %v1955 = vsel %vm1114, %v1943, -inf
        %1956 = vmax.xlane.f32.xlu0 %v1955
        %v1957 = vpop.xlane.xlu0 %1956
        %v1958 = vsub.f32 %v1886, %v1948
        %v1959 = vsub.f32 %v1905, %v1951
        %v1960 = vsub.f32 %v1924, %v1954
        %v1961 = vsub.f32 %v1943, %v1957
        %v1962 = vmul.f32 %v1958, 1.442695
        %v1963 = vpow.pop %v1962
        %v1964 = vmul.f32 %v1959, 1.442695
        %v1965 = vpow.pop %v1964
        %v1966 = vmul.f32 %v1960, 1.442695
        %v1967 = vpow.pop %v1966
        %v1968 = vmul.f32 %v1961, 1.442695
        %v1969 = vpow.pop %v1968
        %v1970 = vsel %vm1114, %v1963, 0.0
        %1971 = vadd.xlane.f32.xlu0 %v1970
        %v1972 = vpop.xlane.xlu0 %1971
        %v1973 = vsel %vm1114, %v1965, 0.0
        %1974 = vadd.xlane.f32.xlu0 %v1973
        %v1975 = vpop.xlane.xlu0 %1974
        %v1976 = vsel %vm1114, %v1967, 0.0
        %1977 = vadd.xlane.f32.xlu0 %v1976
        %v1978 = vpop.xlane.xlu0 %1977
        %v1979 = vsel %vm1114, %v1969, 0.0
        %1980 = vadd.xlane.f32.xlu0 %v1979
        %v1981 = vpop.xlane.xlu0 %1980
        %v1982 = vrcp.pop %v1972
        %v1983 = vrcp.pop %v1975
        %v1984 = vrcp.pop %v1978
        %v1985 = vrcp.pop %v1981
        %v1986 = vmul.f32 %v1963, %v1982
        %v1987 = vmul.f32 %v1965, %v1983
        %v1988 = vmul.f32 %v1967, %v1984
        %v1989 = vmul.f32 %v1969, %v1985
        %1990 = vst.msk [vmem:[%s677] sm:$0xff] %vm1114, %v1986
        %1991 = vst.msk [vmem:[%s677 + $0x8] sm:$0xff] %vm1114, %v1987
        %1992 = vst.msk [vmem:[%s677 + $0x10] sm:$0xff] %vm1114, %v1988
        %1993 = vst.msk [vmem:[%s677 + $0x18] sm:$0xff] %vm1114, %v1989
        %v1994 = vpack.c.bf16 %v1986, %v1986
        %v1995 = vpack.c.bf16 %v1987, %v1987
        %v1996 = vpack.c.bf16 %v1988, %v1988
        %v1997 = vpack.c.bf16 %v1989, %v1989
        %v1998 = vpack.c.bf16 %v1780, %v1780
        %v1999 = vpack.c.bf16 %v1805, %v1805
        %v2000 = vpack.c.bf16 %v1830, %v1830
        %v2001 = vpack.c.bf16 %v1855, %v1855
        %v2003 = vsel %vm1114, %v1994, 0
        %v2006 = vsel %vm1250, %v1998, 0
        %2008 = vmatpush.bf16.msra.mxu0 0
        %2009 = vmatpush.bf16.msra.mxu0 0
        %2010 = vmatpush.bf16.msra.mxu0 0
        %2011 = vmatpush.bf16.msra.mxu0 0
        %2012 = vmatpush.bf16.msra.mxu0 0
        %2013 = vmatpush.bf16.msra.mxu0 0
        %2014 = vmatpush.bf16.msra.mxu0 0
        %2015 = vmatpush.bf16.msra.mxu0 %v2006
        %2016 = vmatmul.bf16.gmra.mxu0 %v2003
        %v2017 = vpop.f32.mrf.mxu0
        %v2018 = vadd.f32 0.0, %v2017
        %v2019 = vpop.f32.mrf.mxu0
        %2020 = vdwg.mxu0
        %v2022 = vsel %vm1114, %v1995, 0
        %v2025 = vsel %vm1250, %v1999, 0
        %2027 = vmatpush.bf16.msra.mxu0 0
        %2028 = vmatpush.bf16.msra.mxu0 0
        %2029 = vmatpush.bf16.msra.mxu0 0
        %2030 = vmatpush.bf16.msra.mxu0 0
        %2031 = vmatpush.bf16.msra.mxu0 0
        %2032 = vmatpush.bf16.msra.mxu0 0
        %2033 = vmatpush.bf16.msra.mxu0 0
        %2034 = vmatpush.bf16.msra.mxu0 %v2025
        %2035 = vmatmul.bf16.gmra.mxu0 %v2022
        %v2036 = vpop.f32.mrf.mxu0
        %v2037 = vadd.f32 0.0, %v2036
        %v2038 = vpop.f32.mrf.mxu0
        %2039 = vdwg.mxu0
        %v2041 = vsel %vm1114, %v1996, 0
        %v2044 = vsel %vm1250, %v2000, 0
        %2046 = vmatpush.bf16.msra.mxu0 0
        %2047 = vmatpush.bf16.msra.mxu0 0
        %2048 = vmatpush.bf16.msra.mxu0 0
        %2049 = vmatpush.bf16.msra.mxu0 0
        %2050 = vmatpush.bf16.msra.mxu0 0
        %2051 = vmatpush.bf16.msra.mxu0 0
        %2052 = vmatpush.bf16.msra.mxu0 0
        %2053 = vmatpush.bf16.msra.mxu0 %v2044
        %2054 = vmatmul.bf16.gmra.mxu0 %v2041
        %v2055 = vpop.f32.mrf.mxu0
        %v2056 = vadd.f32 0.0, %v2055
        %v2057 = vpop.f32.mrf.mxu0
        %2058 = vdwg.mxu0
        %v2060 = vsel %vm1114, %v1997, 0
        %v2063 = vsel %vm1250, %v2001, 0
        %2065 = vmatpush.bf16.msra.mxu0 0
        %2066 = vmatpush.bf16.msra.mxu0 0
        %2067 = vmatpush.bf16.msra.mxu0 0
        %2068 = vmatpush.bf16.msra.mxu0 0
        %2069 = vmatpush.bf16.msra.mxu0 0
        %2070 = vmatpush.bf16.msra.mxu0 0
        %2071 = vmatpush.bf16.msra.mxu0 0
        %2072 = vmatpush.bf16.msra.mxu0 %v2063
        %2073 = vmatmul.bf16.gmra.mxu0 %v2060
        %v2074 = vpop.f32.mrf.mxu0
        %v2075 = vadd.f32 0.0, %v2074
        %v2076 = vpop.f32.mrf.mxu0
        %2077 = vdwg.mxu0
        %v2078 = vpack.c.bf16 %v2018, %v2018
        %v2079 = vpack.c.bf16 %v2037, %v2037
        %v2080 = vpack.c.bf16 %v2056, %v2056
        %v2081 = vpack.c.bf16 %v2075, %v2075
        %v2082 = vld [vmem:[%s10] sm:$0xf]
        %v2083 = vld [vmem:[%s10 + $0x4] sm:$0xf]
        %v2084 = vld [vmem:[%s10 + $0x8] sm:$0xf]
        %v2085 = vld [vmem:[%s10 + $0xc] sm:$0xf]
        %v2087 = vsel %vm1114, %v2078, 0
        %v2090 = vsel %vm1250, %v2082, 0
        %2092 = vmatpush.bf16.msra.mxu0 0
        %2093 = vmatpush.bf16.msra.mxu0 0
        %2094 = vmatpush.bf16.msra.mxu0 0
        %2095 = vmatpush.bf16.msra.mxu0 0
        %2096 = vmatpush.bf16.msra.mxu0 0
        %2097 = vmatpush.bf16.msra.mxu0 0
        %2098 = vmatpush.bf16.msra.mxu0 0
        %2099 = vmatpush.bf16.msra.mxu0 %v2090
        %2100 = vmatmul.bf16.gmra.mxu0 %v2087
        %v2101 = vpop.f32.mrf.mxu0
        %v2102 = vadd.f32 0.0, %v2101
        %v2103 = vpop.f32.mrf.mxu0
        %2104 = vdwg.mxu0
        %v2106 = vsel %vm1114, %v2079, 0
        %v2109 = vsel %vm1250, %v2083, 0
        %2111 = vmatpush.bf16.msra.mxu0 0
        %2112 = vmatpush.bf16.msra.mxu0 0
        %2113 = vmatpush.bf16.msra.mxu0 0
        %2114 = vmatpush.bf16.msra.mxu0 0
        %2115 = vmatpush.bf16.msra.mxu0 0
        %2116 = vmatpush.bf16.msra.mxu0 0
        %2117 = vmatpush.bf16.msra.mxu0 0
        %2118 = vmatpush.bf16.msra.mxu0 %v2109
        %2119 = vmatmul.bf16.gmra.mxu0 %v2106
        %v2120 = vpop.f32.mrf.mxu0
        %v2121 = vadd.f32 0.0, %v2120
        %v2122 = vpop.f32.mrf.mxu0
        %2123 = vdwg.mxu0
        %v2125 = vsel %vm1114, %v2080, 0
        %v2128 = vsel %vm1250, %v2084, 0
        %2130 = vmatpush.bf16.msra.mxu0 0
        %2131 = vmatpush.bf16.msra.mxu0 0
        %2132 = vmatpush.bf16.msra.mxu0 0
        %2133 = vmatpush.bf16.msra.mxu0 0
        %2134 = vmatpush.bf16.msra.mxu0 0
        %2135 = vmatpush.bf16.msra.mxu0 0
        %2136 = vmatpush.bf16.msra.mxu0 0
        %2137 = vmatpush.bf16.msra.mxu0 %v2128
        %2138 = vmatmul.bf16.gmra.mxu0 %v2125
        %v2139 = vpop.f32.mrf.mxu0
        %v2140 = vadd.f32 0.0, %v2139
        %v2141 = vpop.f32.mrf.mxu0
        %2142 = vdwg.mxu0
        %v2144 = vsel %vm1114, %v2081, 0
        %v2147 = vsel %vm1250, %v2085, 0
        %2149 = vmatpush.bf16.msra.mxu0 0
        %2150 = vmatpush.bf16.msra.mxu0 0
        %2151 = vmatpush.bf16.msra.mxu0 0
        %2152 = vmatpush.bf16.msra.mxu0 0
        %2153 = vmatpush.bf16.msra.mxu0 0
        %2154 = vmatpush.bf16.msra.mxu0 0
        %2155 = vmatpush.bf16.msra.mxu0 0
        %2156 = vmatpush.bf16.msra.mxu0 %v2147
        %2157 = vmatmul.bf16.gmra.mxu0 %v2144
        %v2158 = vpop.f32.mrf.mxu0
        %v2159 = vadd.f32 0.0, %v2158
        %v2160 = vpop.f32.mrf.mxu0
        %2161 = vdwg.mxu0
        %v2162 = vsel %vm786, %v2102, 0.0
        %v2163 = vsel %vm786, %v2121, 0.0
        %v2164 = vadd.f32 %v2162, %v2163
        %v2165 = vsel %vm786, %v2140, 0.0
        %v2166 = vadd.f32 %v2164, %v2165
        %v2167 = vsel %vm786, %v2159, 0.0
        %v2168 = vadd.f32 %v2166, %v2167
        %v2169 = vld [vmem:[%s11] sm:$0x1]
        %v2171 = vperm.slane %v2169, 0
        %v2173 = vadd.f32 %v2168, %v2171
        %v2174 = vadd.f32 %v1453, %v2173
        %v2175 = vsel %vm786, %v2174, 0.0
        %2176 = vadd.xlane.f32.xlu0 %v2175
        %v2177 = vpop.xlane.xlu0 %2176
        %v2178 = vmul.f32 %v2177, %v1430
        %v2179 = vsub.f32 %v2174, %v2178
        %v2180 = vmul.f32 %v2179, %v2179
        %v2181 = vsel %vm786, %v2180, 0.0
        %2182 = vadd.xlane.f32.xlu0 %v2181
        %v2183 = vpop.xlane.xlu0 %2182
        %v2184 = vmul.f32 %v2183, %v1430
        %v2185 = vadd.f32 %v2184, 1e-05
        %v2186 = vrsqrt.pop %v2185
        %v2187 = vmul.f32 %v2186, %v2185
        %v2188 = vmul.f32 %v2187, %v2186
        %v2189 = vmul.f32 0.5, %v2188
        %v2190 = vsub.f32 1.5, %v2189
        %v2191 = vmul.f32 %v2186, %v2190
        %vm2192 = vweird.f32 %v2185
        %vm2193 = vweird.f32 %v2186
        %vm2194 = vmor %vm2192, %vm2193
        %v2195 = vsel %vm2194, %v2186, %v2191
        %v2196 = vmul.f32 %v2179, %v2195
        %v2197 = vperm.slane %v699, 1
        %v2198 = vmul.f32 %v2196, %v2197
        %v2199 = vperm.slane %v700, 1
        %v2200 = vadd.f32 %v2198, %v2199
        %v2201 = vpack.c.bf16 %v2200, %v2200
        %v2202 = vld [vmem:[%s14] sm:$0xf]
        %v2203 = vld [vmem:[%s14 + $0x4] sm:$0xf]
        %v2204 = vld [vmem:[%s14 + $0x8] sm:$0xf]
        %v2205 = vld [vmem:[%s14 + $0xc] sm:$0xf]
        %v2206 = vld [vmem:[%s15] sm:$0x1]
        %v2208 = vperm.slane %v2206, 0
        %v2214 = vunpack.c.l.b16 %v2202
        %v2215 = vunpack.c.l.b16 %v2203
        %v2216 = vunpack.c.l.b16 %v2204
        %v2217 = vunpack.c.l.b16 %v2205
        %v2218 = vpack.c.b16 %v2215, %v2214
        %v2219 = vpack.c.b16 %v2217, %v2216
        %v2223 = vsel %vm786, %v2201, 0
        %2225 = vmatpush.bf16.msra.mxu0 0
        %2226 = vmatpush.bf16.msra.mxu0 0
        %2227 = vmatpush.bf16.msra.mxu0 0
        %2228 = vmatpush.bf16.msra.mxu0 0
        %2229 = vmatpush.bf16.msra.mxu0 0
        %2230 = vmatpush.bf16.msra.mxu0 0
        %2231 = vmatpush.bf16.msra.mxu0 %v2219
        %2232 = vmatpush.bf16.msra.mxu0 %v2218
        %2233 = vmatmul.bf16.gmra.mxu0 %v2223
        %v2234 = vpop.f32.mrf.mxu0
        %v2235 = vadd.f32 %v2208, %v2234
        %v2236 = vpop.f32.mrf.mxu0
        %2237 = vdwg.mxu0
        %v2238 = vmax.f32 %v2235, 0.0
        %v2239 = vpack.c.bf16 %v2238, %v2238
        %v2240 = vld [vmem:[%s16] sm:$0xf]
        %v2241 = vld [vmem:[%s16 + $0x4] sm:$0xf]
        %v2242 = vld [vmem:[%s16 + $0x8] sm:$0xf]
        %v2243 = vld [vmem:[%s16 + $0xc] sm:$0xf]
        %v2244 = vld [vmem:[%s16 + $0x10] sm:$0xf]
        %v2245 = vld [vmem:[%s16 + $0x14] sm:$0xf]
        %v2246 = vld [vmem:[%s16 + $0x18] sm:$0xf]
        %v2247 = vld [vmem:[%s16 + $0x1c] sm:$0xf]
        %v2248 = vld [vmem:[%s17] sm:$0x1]
        %v2250 = vperm.slane %v2248, 0
        %v2260 = vunpack.c.l.b16 %v2240
        %v2261 = vunpack.c.l.b16 %v2241
        %v2262 = vunpack.c.l.b16 %v2242
        %v2263 = vunpack.c.l.b16 %v2243
        %v2264 = vunpack.c.l.b16 %v2244
        %v2265 = vunpack.c.l.b16 %v2245
        %v2266 = vunpack.c.l.b16 %v2246
        %v2267 = vunpack.c.l.b16 %v2247
        %v2268 = vpack.c.b16 %v2261, %v2260
        %v2269 = vpack.c.b16 %v2263, %v2262
        %v2270 = vpack.c.b16 %v2265, %v2264
        %v2271 = vpack.c.b16 %v2267, %v2266
        %vm2276 = vcmask 523264
        %v2278 = vsel %vm2276, %v2239, 0
        %2280 = vmatpush.bf16.msra.mxu0 0
        %2281 = vmatpush.bf16.msra.mxu0 0
        %2282 = vmatpush.bf16.msra.mxu0 0
        %2283 = vmatpush.bf16.msra.mxu0 0
        %2284 = vmatpush.bf16.msra.mxu0 %v2271
        %2285 = vmatpush.bf16.msra.mxu0 %v2270
        %2286 = vmatpush.bf16.msra.mxu0 %v2269
        %2287 = vmatpush.bf16.msra.mxu0 %v2268
        %2288 = vmatmul.bf16.gmra.mxu0 %v2278
        %v2289 = vpop.f32.mrf.mxu0
        %v2290 = vadd.f32 %v2250, %v2289
        %v2291 = vpop.f32.mrf.mxu0
        %2292 = vdwg.mxu0
        %v2293 = vadd.f32 %v2200, %v2290
        %v2294 = vsel %vm786, %v2293, 0.0
        %2295 = vadd.xlane.f32.xlu0 %v2294
        %v2296 = vpop.xlane.xlu0 %2295
        %v2297 = vmul.f32 %v2296, %v1430
        %v2298 = vsub.f32 %v2293, %v2297
        %v2299 = vmul.f32 %v2298, %v2298
        %v2300 = vsel %vm786, %v2299, 0.0
        %2301 = vadd.xlane.f32.xlu0 %v2300
        %v2302 = vpop.xlane.xlu0 %2301
        %v2303 = vmul.f32 %v2302, %v1430
        %v2304 = vadd.f32 %v2303, 1e-05
        %v2305 = vrsqrt.pop %v2304
        %v2306 = vmul.f32 %v2305, %v2304
        %v2307 = vmul.f32 %v2306, %v2305
        %v2308 = vmul.f32 0.5, %v2307
        %v2309 = vsub.f32 1.5, %v2308
        %v2310 = vmul.f32 %v2305, %v2309
        %vm2311 = vweird.f32 %v2304
        %vm2312 = vweird.f32 %v2305
        %vm2313 = vmor %vm2311, %vm2312
        %v2314 = vsel %vm2313, %v2305, %v2310
        %v2315 = vmul.f32 %v2298, %v2314
        %v2316 = vperm.slane %v699, 2
        %v2317 = vmul.f32 %v2315, %v2316
        %v2318 = vperm.slane %v700, 2
        %v2319 = vadd.f32 %v2317, %v2318
        %2320 = vst.msk [vmem:[%s663] sm:$0xff] %vm786, %v2319
        %s2321 = sand.u32 %s444, 1
        %s2322 = scalar_lea.sflag [#allocation3], %s2321
        %s2323 = sand.u32 %s444, 1
        %s2324 = smul.addr %s2323, 8
        %s2325 = scalar_lea.vmem [#allocation2], %s2324
        %s2326 = sand.u32 %s38, 1
        %s2327 = scalar_lea.sflag [#allocation5], %s2326
        %s2328 = sand.u32 %s470, 1
        %s2329 = smul.addr %s2328, 32
        %s2330 = scalar_lea.vmem [#allocation4], %s2329
        %s2331 = sand.u32 %s38, 1
        %s2332 = scalar_lea.sflag [#allocation5], %s2331
        %s2333 = sand.u32 %s496, 1
        %s2334 = smul.addr %s2333, 32
        %s2335 = scalar_lea.vmem [#allocation6], %s2334
        // Predicated region
        $region93: #{tpu_custom_call.1} parent=91 // pred_check
          %p2336 = pneg %p454
        $region94: #{tpu_custom_call.1} parent=91 // pred_check_branch
          %2338 = sbr.rel (%p2336) target = $region96
        $region95: #{tpu_custom_call.1} parent=91 // pred_region
          %2340 = vsyncadd %s2322, 0
          %s2341 = smul.addr %s38, 8
          %s2342 = scalar_lea.hbm %s18, %s2341
          %s2344 = sshll.u32 %s2325, 4
          %s2345 = int_to_ptr.vmem [resolvable:$true] %s2344
          %s2346 = sshll.u32 %s2342, 4
          %s2347 = int_to_ptr.hbm [resolvable:$true] %s2346
          %2349 = dma.vmem_to_hbm [thread:$0]  %s2345, 128, %s2347, %s2322
        $region96: #{tpu_custom_call.1} parent=91 // pred_fallthru
          _
        // Predicated region
        $region97: #{tpu_custom_call.1} parent=91 // pred_check
          %p2350 = pneg %p480
        $region98: #{tpu_custom_call.1} parent=91 // pred_check_branch
          %2352 = sbr.rel (%p2350) target = $region100
        $region99: #{tpu_custom_call.1} parent=91 // pred_region
          %2354 = vsyncadd %s2327, 0
          %s2355 = smul.addr %s38, 4
          %s2356 = smul.addr %s2355, 8
          %s2357 = scalar_lea.hbm %s19, %s2356
          %s2358 = sshll.u32 %s2330, 4
          %s2359 = int_to_ptr.vmem [resolvable:$true] %s2358
          %s2360 = sshll.u32 %s2357, 4
          %s2361 = int_to_ptr.hbm [resolvable:$true] %s2360
          %2366 = dma.vmem_to_hbm [thread:$0]  %s2359, 512, %s2361, %s2327, 128, 128, 8
        $region100: #{tpu_custom_call.1} parent=91 // pred_fallthru
          _
        // Predicated region
        $region101: #{tpu_custom_call.1} parent=91 // pred_check
          %p2367 = pneg %p506
        $region102: #{tpu_custom_call.1} parent=91 // pred_check_branch
          %2369 = sbr.rel (%p2367) target = $region104
        $region103: #{tpu_custom_call.1} parent=91 // pred_region
          %2371 = vsyncadd %s2332, 0
          %s2372 = smul.addr %s38, 4
          %s2373 = smul.addr %s2372, 8
          %s2374 = scalar_lea.hbm %s20, %s2373
          %s2375 = sshll.u32 %s2335, 4
          %s2376 = int_to_ptr.vmem [resolvable:$true] %s2375
          %s2377 = sshll.u32 %s2374, 4
          %s2378 = int_to_ptr.hbm [resolvable:$true] %s2377
          %2383 = dma.vmem_to_hbm [thread:$0]  %s2376, 512, %s2378, %s2332, 128, 128, 8
        $region104: #{tpu_custom_call.1} parent=91 // pred_fallthru
          _
      $region92: #{tpu_custom_call.1} parent=5 // pred_fallthru
        _
      %p2384 = scmp.le.s32.totalorder 2, %s33
      // Predicated region
      $region105: #{tpu_custom_call.1} parent=5 // pred_check
        %p2385 = pneg %p2384
      $region106: #{tpu_custom_call.1} parent=5 // pred_check_branch
        %2387 = sbr.rel (%p2385) target = $region108
      $region107: #{tpu_custom_call.1} parent=5 // pred_region
        %s2388 = ssub.s32 %s33, 2
        // Predicated region
        $region109: #{tpu_custom_call.1} parent=107 // pred_check
          %p2389 = pneg %p460
        $region110: #{tpu_custom_call.1} parent=107 // pred_check_branch
          %2391 = sbr.rel (%p2389) target = $region112
        $region111: #{tpu_custom_call.1} parent=107 // pred_region
          %s2392 = sand.u32 %s445, 1
          %s2393 = scalar_lea.sflag [#allocation3], %s2392
          %s2394 = sand.u32 %s445, 1
          %s2395 = smul.addr %s2394, 8
          %s2396 = scalar_lea.vmem [#allocation2], %s2395
          %2398 = dma.done %s2393, 128
        $region112: #{tpu_custom_call.1} parent=107 // pred_fallthru
          _
        // Predicated region
        $region113: #{tpu_custom_call.1} parent=107 // pred_check
          %p2399 = pneg %p486
        $region114: #{tpu_custom_call.1} parent=107 // pred_check_branch
          %2401 = sbr.rel (%p2399) target = $region116
        $region115: #{tpu_custom_call.1} parent=107 // pred_region
          %s2402 = sand.u32 %s39, 1
          %s2403 = scalar_lea.sflag [#allocation5], %s2402
          %s2404 = sand.u32 %s471, 1
          %s2405 = smul.addr %s2404, 32
          %s2406 = scalar_lea.vmem [#allocation4], %s2405
          %2408 = dma.done %s2403, 512
        $region116: #{tpu_custom_call.1} parent=107 // pred_fallthru
          _
        // Predicated region
        $region117: #{tpu_custom_call.1} parent=107 // pred_check
          %p2409 = pneg %p512
        $region118: #{tpu_custom_call.1} parent=107 // pred_check_branch
          %2411 = sbr.rel (%p2409) target = $region120
        $region119: #{tpu_custom_call.1} parent=107 // pred_region
          %s2412 = sand.u32 %s39, 1
          %s2413 = scalar_lea.sflag [#allocation5], %s2412
          %s2414 = sand.u32 %s497, 1
          %s2415 = smul.addr %s2414, 32
          %s2416 = scalar_lea.vmem [#allocation6], %s2415
          %2418 = dma.done %s2413, 512
        $region120: #{tpu_custom_call.1} parent=107 // pred_fallthru
          _
      $region108: #{tpu_custom_call.1} parent=5 // pred_fallthru
        _
    $region6: #{tpu_custom_call.1} parent=1 // loop_footer
      %s37 = sadd.s32 1, %s33
    $region7: #{tpu_custom_call.1} parent=1 // loop_footer_branch
      %32 = sbr.rel target = $region3
    $region8: #{tpu_custom_call.1} parent=1 // loop_exit
      _
    %2419 = vsyncpa [#allocation3], 1
    %s2420 = scalar_lea.sflag [#allocation3], 1
    %2421 = vsyncpa %s2420, 1
    %2422 = vsyncpa [#allocation5], 1
    %s2423 = scalar_lea.sflag [#allocation5], 1
    %2424 = vsyncpa %s2423, 1

</llo_original>
